<compile_context>
chip_gen: v5e
topology: v5e:2x2
jax: 0.10.0
libtpu: 0.0.40
codegen_flags: <defaults>
</compile_context>

<pallas_src>
import functools

import jax
import jax.numpy as jnp
from jax import lax
from jax.experimental import pallas as pl
from jax.experimental.pallas import tpu as pltpu


def _attn_kernel(q_ref, k_ref, v_ref, wo_ref, bo_ref, o_ref,
                 m_scr, l_scr, acc_scr, y_scr,
                 *, causal, tq, tk, hp):
    qi = pl.program_id(1)
    hg = pl.program_id(2)
    kv = pl.program_id(3)
    n_hg = pl.num_programs(2)
    n_kv = pl.num_programs(3)

    # Zero the (b, qi) output-projection accumulator once per output tile.
    @pl.when(jnp.logical_and(hg == 0, kv == 0))
    def _():
        y_scr[...] = jnp.zeros_like(y_scr)

    # Reset the online-softmax state at the start of every (b, qi, head-group) pass.
    @pl.when(kv == 0)
    def _():
        m_scr[...] = jnp.full_like(m_scr, -jnp.inf)
        l_scr[...] = jnp.zeros_like(l_scr)
        acc_scr[...] = jnp.zeros_like(acc_scr)

    def compute_tile(masked):
        q = q_ref[0]          # (hp, tq, Dh) bf16, already scaled
        k = k_ref[0]          # (hp, tk, Dh) bf16
        v = v_ref[0]          # (hp, tk, Dh) bf16

        # sim = einsum('h i d, h j d -> h i j') batched over the packed heads.
        s = jnp.einsum('hqd,hkd->hqk', q, k,
                       preferred_element_type=jnp.float32)       # (hp, tq, tk) f32

        if masked:
            # Only the diagonal-crossing tile pays for the iota mask (VPU work).
            row = qi * tq + lax.broadcasted_iota(jnp.int32, (hp, tq, tk), 1)
            col = kv * tk + lax.broadcasted_iota(jnp.int32, (hp, tq, tk), 2)
            s = jnp.where(col > row, -jnp.finfo(jnp.float32).max, s)

        # Online softmax update (f32).
        m_prev = m_scr[...]
        m_new = jnp.maximum(m_prev, jnp.max(s, axis=-1, keepdims=True))
        alpha = jnp.exp(m_prev - m_new)
        p = jnp.exp(s - m_new)
        l_scr[...] = alpha * l_scr[...] + jnp.sum(p, axis=-1, keepdims=True)
        acc_scr[...] = alpha * acc_scr[...] + jnp.einsum(
            'hqk,hkd->hqd', p.astype(jnp.bfloat16), v,
            preferred_element_type=jnp.float32)
        m_scr[...] = m_new

    if causal:
        row_start = qi * tq
        row_end = row_start + (tq - 1)
        col_start = kv * tk
        col_end = col_start + (tk - 1)

        # 3-way classification: skip above-diagonal, unmasked below, masked on-diagonal.
        @pl.when(col_start <= row_end)
        def _():
            @pl.when(col_end <= row_start)
            def _():
                compute_tile(masked=False)

            @pl.when(col_end > row_start)
            def _():
                compute_tile(masked=True)
    else:
        compute_tile(masked=False)

    # After the last kv tile: normalize and fold this head group into the projection.
    @pl.when(kv == n_kv - 1)
    def _():
        out_h = (acc_scr[...] * pl.reciprocal(l_scr[...], approx=True)
                 ).astype(jnp.bfloat16)                           # (hp, tq, Dh)
        y = y_scr[...]
        for hh in range(hp):
            y = y + jnp.dot(out_h[hh], wo_ref[hg * hp + hh],
                            preferred_element_type=jnp.float32)   # (tq, D)
        y_scr[...] = y

        @pl.when(hg == n_hg - 1)
        def _():
            o_ref[0] = (y_scr[...] + bo_ref[...]).astype(o_ref.dtype)


@functools.partial(jax.jit, static_argnames=("heads", "dim_head", "causal", "tq", "tk"))
def attention_forward(x, wq, wk, wv, wo, bo, *, heads, dim_head, causal=False,
                      tq=None, tk=None):
    """x: (B, N, dim); wq/wk/wv: (dim, H*Dh); wo: (H*Dh, dim); bo: (dim,) or (1, dim)."""
    B, N, D = x.shape
    inner = heads * dim_head
    scale = dim_head ** -0.5
    hp = 2 if heads % 2 == 0 else 1          # heads packed per grid step

    if tq is None:
        tq = min(N, 256)                     # 512 worth sweeping on v5e/v6e; keep 256 for v7x VMEM
    if tk is None:
        tk = min(N, 256)
    assert N % tq == 0 and N % tk == 0, "seq len must be divisible by tile sizes"
    assert tq % 8 == 0 and tk % 8 == 0

    # --- Projections hoisted out of the kernel (one GEMM each) -> (B, H, N, Dh) bf16.
    xf = x.astype(jnp.float32)
    q = (xf @ wq.astype(jnp.float32)) * scale
    k = xf @ wk.astype(jnp.float32)
    v = xf @ wv.astype(jnp.float32)

    def split_heads(t):
        return (t.reshape(B, N, heads, dim_head)
                 .transpose(0, 2, 1, 3)
                 .astype(jnp.bfloat16))

    q, k, v = split_heads(q), split_heads(k), split_heads(v)

    wo_h = wo.reshape(heads, dim_head, D).astype(jnp.bfloat16)    # stays resident in VMEM
    bo_f = bo.reshape(1, D).astype(jnp.float32)

    n_q, n_hg, n_kv = N // tq, heads // hp, N // tk
    grid = (B, n_q, n_hg, n_kv)

    q_spec = pl.BlockSpec((1, hp, tq, dim_head), lambda b, qi, hg, kv: (b, hg, qi, 0))

    # For causal, clamp the kv block index so fully-skipped steps re-use the
    # previous block (no DMA issued for tiles that are never computed).
    if causal:
        def kv_map(b, qi, hg, kv):
            last_kv = (qi * tq + (tq - 1)) // tk
            return (b, hg, jnp.minimum(kv, last_kv), 0)
    else:
        def kv_map(b, qi, hg, kv):
            return (b, hg, kv, 0)
    kv_spec = pl.BlockSpec((1, hp, tk, dim_head), kv_map)

    # Constant index map -> DMA'd once, resident across the whole grid.
    wo_spec = pl.BlockSpec((heads, dim_head, D), lambda b, qi, hg, kv: (0, 0, 0))
    bo_spec = pl.BlockSpec((1, D), lambda b, qi, hg, kv: (0, 0))
    out_spec = pl.BlockSpec((1, tq, D), lambda b, qi, hg, kv: (b, qi, 0))

    kernel = functools.partial(_attn_kernel, causal=causal, tq=tq, tk=tk, hp=hp)

    flops = (4 * B * heads * N * N * dim_head        # q@k^T and attn@v
             + 2 * B * N * inner * D)                # per-head output projection
    bytes_accessed = (3 * B * inner * N * 2          # q, k, v (bf16)
                      + inner * D * 2 + D * 4        # wo (bf16) + bias (f32)
                      + B * N * D * x.dtype.itemsize)
    cost = pl.CostEstimate(flops=flops,
                           transcendentals=B * heads * N * N,
                           bytes_accessed=bytes_accessed)

    return pl.pallas_call(
        kernel,
        out_shape=jax.ShapeDtypeStruct((B, N, D), x.dtype),
        grid_spec=pltpu.PrefetchScalarGridSpec(
            num_scalar_prefetch=0,
            grid=grid,
            in_specs=[q_spec, kv_spec, kv_spec, wo_spec, bo_spec],
            out_specs=out_spec,
            scratch_shapes=[
                pltpu.VMEM((hp, tq, 1), jnp.float32),          # running max
                pltpu.VMEM((hp, tq, 1), jnp.float32),          # running sum
                pltpu.VMEM((hp, tq, dim_head), jnp.float32),   # attn @ v accumulator
                pltpu.VMEM((tq, D), jnp.float32),              # output-proj accumulator (over heads)
            ]),
        compiler_params=pltpu.CompilerParams(
            dimension_semantics=("parallel", "parallel", "arbitrary", "arbitrary"),
            vmem_limit_bytes=48 * 1024 * 1024),
        cost_estimate=cost,
    )(q, k, v, wo_h, bo_f)


def attention_reference(x, wq, wk, wv, wo, bo, *, heads, dim_head, causal=False):
    """Pure-JAX reference mirroring the PyTorch forward (no mask/context/rope/null_kv)."""
    B, N, D = x.shape
    scale = dim_head ** -0.5
    q = (x @ wq) * scale
    k = x @ wk
    v = x @ wv

    def split(t):  # b n (h d) -> b h n d
        return t.reshape(B, N, heads, dim_head).transpose(0, 2, 1, 3)

    q, k, v = split(q), split(k), split(v)
    sim = jnp.einsum('bhid,bhjd->bhij', q, k)
    if causal:
        i = jnp.arange(N)[:, None]
        j = jnp.arange(N)[None, :]
        sim = jnp.where(j > i, -jnp.finfo(sim.dtype).max, sim)
    attn = jax.nn.softmax(sim, axis=-1)
    out = jnp.einsum('bhij,bhjd->bhid', attn, v)
    out = out.transpose(0, 2, 1, 3).reshape(B, N, heads * dim_head)
    return out @ wo + bo.reshape(1, -1)


if __name__ == "__main__":
    # Small config consistent with the module: dim=32, dim_head=64 (default), heads=4.
    B, N, DIM = 2, 64, 32
    HEADS, DIM_HEAD = 4, 64
    INNER = HEADS * DIM_HEAD

    key = jax.random.PRNGKey(0)
    kx, kq, kk, kv_, ko, kb = jax.random.split(key, 6)

    x = jax.random.normal(kx, (B, N, DIM), dtype=jnp.float32)
    wq = jax.random.normal(kq, (DIM, INNER), dtype=jnp.float32) * 0.05
    wk = jax.random.normal(kk, (DIM, INNER), dtype=jnp.float32) * 0.05
    wv = jax.random.normal(kv_, (DIM, INNER), dtype=jnp.float32) * 0.05
    wo = jax.random.normal(ko, (INNER, DIM), dtype=jnp.float32) * 0.05
    bo = jax.random.normal(kb, (1, DIM), dtype=jnp.float32) * 0.05

    for causal in (False, True):
        out = attention_forward(x, wq, wk, wv, wo, bo,
                                heads=HEADS, dim_head=DIM_HEAD, causal=causal,
                                tq=32, tk=32)
        out = jax.block_until_ready(out)
        ref = attention_reference(x, wq, wk, wv, wo, bo,
                                  heads=HEADS, dim_head=DIM_HEAD, causal=causal)
        assert out.shape == (B, N, DIM)
        # bf16 MXU operands + approx reciprocal -> slightly looser tolerance than f32.
        assert jnp.allclose(out, ref, atol=2e-2, rtol=2e-2), \
            f"mismatch vs JAX reference (causal={causal})"

    print("KERNEL_OK")
</pallas_src>

<mosaic_0001>
module attributes {stable_mosaic.version = 11 : i64} {
  func.func @_attn_kernel(%arg0: i32, %arg1: i32, %arg2: i32, %arg3: i32, %arg4: memref<1x2x32x64xbf16, #tpu.memory_space<vmem>>, %arg5: memref<1x2x32x64xbf16, #tpu.memory_space<vmem>>, %arg6: memref<1x2x32x64xbf16, #tpu.memory_space<vmem>>, %arg7: memref<4x64x32xbf16, #tpu.memory_space<vmem>>, %arg8: memref<1x32xf32, #tpu.memory_space<vmem>>, %arg9: memref<1x32x32xf32, #tpu.memory_space<vmem>>, %arg10: memref<2x32x1xf32, #tpu.memory_space<vmem>>, %arg11: memref<2x32x1xf32, #tpu.memory_space<vmem>>, %arg12: memref<2x32x64xf32, #tpu.memory_space<vmem>>, %arg13: memref<32x32xf32, #tpu.memory_space<vmem>>) attributes {dimension_semantics = [#tpu.dimension_semantics<parallel>, #tpu.dimension_semantics<parallel>, #tpu.dimension_semantics<arbitrary>, #tpu.dimension_semantics<arbitrary>], iteration_bounds = array<i64: 2, 2, 2, 2>, scalar_prefetch = 0 : i64, scratch_operands = 4 : i64, tpu.core_type = #tpu.core_type<tc>, window_params = [{transform_indices = @transform_0, window_bounds = array<i64: 1, 2, 32, 64>}, {transform_indices = @transform_1, window_bounds = array<i64: 1, 2, 32, 64>}, {transform_indices = @transform_2, window_bounds = array<i64: 1, 2, 32, 64>}, {pipeline_mode = #tpu.pipeline_mode<synchronous>, transform_indices = @transform_3, window_bounds = array<i64: 4, 64, 32>}, {pipeline_mode = #tpu.pipeline_mode<synchronous>, transform_indices = @transform_4, window_bounds = array<i64: 1, 32>}, {transform_indices = @transform_5, window_bounds = array<i64: 1, 32, 32>}]} {
    %c0_i32 = arith.constant 0 : i32
    %0 = arith.cmpi eq, %arg2, %c0_i32 : i32
    %c0_i32_0 = arith.constant 0 : i32
    %1 = arith.cmpi eq, %arg3, %c0_i32_0 : i32
    %2 = arith.andi %0, %1 : i1
    %3 = arith.extui %2 : i1 to i32
    %c0_i32_1 = arith.constant 0 : i32
    %4 = arith.cmpi ne, %3, %c0_i32_1 : i32
    scf.if %4 {
      %cst_37 = arith.constant 0.000000e+00 : f32
      %41 = vector.broadcast %cst_37 : f32 to vector<32x32xf32>
      %c0_38 = arith.constant 0 : index
      %c0_39 = arith.constant 0 : index
      %42 = vector.load %arg13[%c0_38, %c0_39] : memref<32x32xf32, #tpu.memory_space<vmem>>, vector<32x32xf32>
      tpu.vector_store %arg13[%c0_38, %c0_39], %41 {strides = array<i32>} : memref<32x32xf32, #tpu.memory_space<vmem>>, vector<32x32xf32>,
    } else {
    }
    %c0_i32_2 = arith.constant 0 : i32
    %5 = arith.cmpi eq, %arg3, %c0_i32_2 : i32
    %6 = arith.extui %5 : i1 to i32
    %c0_i32_3 = arith.constant 0 : i32
    %7 = arith.cmpi ne, %6, %c0_i32_3 : i32
    scf.if %7 {
      %cst_37 = arith.constant 0xFF800000 : f32
      %41 = vector.broadcast %cst_37 : f32 to vector<2x32x1xf32>
      %c0_38 = arith.constant 0 : index
      %c0_39 = arith.constant 0 : index
      %c0_40 = arith.constant 0 : index
      %42 = vector.load %arg10[%c0_38, %c0_39, %c0_40] : memref<2x32x1xf32, #tpu.memory_space<vmem>>, vector<2x32x1xf32>
      tpu.vector_store %arg10[%c0_38, %c0_39, %c0_40], %41 {strides = array<i32>} : memref<2x32x1xf32, #tpu.memory_space<vmem>>, vector<2x32x1xf32>,
      %cst_41 = arith.constant 0.000000e+00 : f32
      %43 = vector.broadcast %cst_41 : f32 to vector<2x32x1xf32>
      %c0_42 = arith.constant 0 : index
      %c0_43 = arith.constant 0 : index
      %c0_44 = arith.constant 0 : index
      %44 = vector.load %arg11[%c0_42, %c0_43, %c0_44] : memref<2x32x1xf32, #tpu.memory_space<vmem>>, vector<2x32x1xf32>
      tpu.vector_store %arg11[%c0_42, %c0_43, %c0_44], %43 {strides = array<i32>} : memref<2x32x1xf32, #tpu.memory_space<vmem>>, vector<2x32x1xf32>,
      %cst_45 = arith.constant 0.000000e+00 : f32
      %45 = vector.broadcast %cst_45 : f32 to vector<2x32x64xf32>
      %c0_46 = arith.constant 0 : index
      %c0_47 = arith.constant 0 : index
      %c0_48 = arith.constant 0 : index
      %46 = vector.load %arg12[%c0_46, %c0_47, %c0_48] : memref<2x32x64xf32, #tpu.memory_space<vmem>>, vector<2x32x64xf32>
      tpu.vector_store %arg12[%c0_46, %c0_47, %c0_48], %45 {strides = array<i32>} : memref<2x32x64xf32, #tpu.memory_space<vmem>>, vector<2x32x64xf32>,
    } else {
    }
    %c0 = arith.constant 0 : index
    %c0_4 = arith.constant 0 : index
    %c0_5 = arith.constant 0 : index
    %c0_6 = arith.constant 0 : index
    %8 = vector.load %arg4[%c0, %c0_4, %c0_5, %c0_6] : memref<1x2x32x64xbf16, #tpu.memory_space<vmem>>, vector<1x2x32x64xbf16>
    %9 = vector.shape_cast %8 : vector<1x2x32x64xbf16> to vector<2x32x64xbf16>
    %c0_7 = arith.constant 0 : index
    %c0_8 = arith.constant 0 : index
    %c0_9 = arith.constant 0 : index
    %c0_10 = arith.constant 0 : index
    %10 = vector.load %arg5[%c0_7, %c0_8, %c0_9, %c0_10] : memref<1x2x32x64xbf16, #tpu.memory_space<vmem>>, vector<1x2x32x64xbf16>
    %11 = vector.shape_cast %10 : vector<1x2x32x64xbf16> to vector<2x32x64xbf16>
    %c0_11 = arith.constant 0 : index
    %c0_12 = arith.constant 0 : index
    %c0_13 = arith.constant 0 : index
    %c0_14 = arith.constant 0 : index
    %12 = vector.load %arg6[%c0_11, %c0_12, %c0_13, %c0_14] : memref<1x2x32x64xbf16, #tpu.memory_space<vmem>>, vector<1x2x32x64xbf16>
    %13 = vector.shape_cast %12 : vector<1x2x32x64xbf16> to vector<2x32x64xbf16>
    "tpu.trace_start"() <{level = 10 : i32, message = "hqd,hkd->hqk"}> : () -> ()
    %cst = arith.constant dense<0.000000e+00> : vector<2x32x32xf32>
    %14 = tpu.matmul %9, %11, %cst {dimension_numbers = #tpu.dot_dimension_numbers<[2], [2], [1], [1], [0, 0, 0, 1, 1, 1], [0], [0]>} : vector<2x32x64xbf16>, vector<2x32x64xbf16>, vector<2x32x32xf32> -> vector<2x32x32xf32>
    "tpu.trace_stop"() : () -> ()
    %c0_15 = arith.constant 0 : index
    %c0_16 = arith.constant 0 : index
    %c0_17 = arith.constant 0 : index
    %15 = vector.load %arg10[%c0_15, %c0_16, %c0_17] : memref<2x32x1xf32, #tpu.memory_space<vmem>>, vector<2x32x1xf32>
    %cst_18 = arith.constant dense<0xFF800000> : vector<2x32xf32>
    %16 = vector.multi_reduction <maximumf>, %14, %cst_18 [2] : vector<2x32x32xf32> to vector<2x32xf32>
    %17 = vector.shape_cast %16 : vector<2x32xf32> to vector<2x32x1xf32>
    %18 = arith.maximumf %15, %17 : vector<2x32x1xf32>
    %19 = arith.subf %15, %18 : vector<2x32x1xf32>
    %20 = math.exp %19 : vector<2x32x1xf32>
    %21 = vector.broadcast %18 : vector<2x32x1xf32> to vector<2x32x32xf32>
    %22 = arith.subf %14, %21 : vector<2x32x32xf32>
    %23 = math.exp %22 : vector<2x32x32xf32>
    %c0_19 = arith.constant 0 : index
    %c0_20 = arith.constant 0 : index
    %c0_21 = arith.constant 0 : index
    %24 = vector.load %arg11[%c0_19, %c0_20, %c0_21] : memref<2x32x1xf32, #tpu.memory_space<vmem>>, vector<2x32x1xf32>
    %25 = arith.mulf %20, %24 : vector<2x32x1xf32>
    %cst_22 = arith.constant dense<0.000000e+00> : vector<2x32xf32>
    %26 = vector.multi_reduction <add>, %23, %cst_22 [2] : vector<2x32x32xf32> to vector<2x32xf32>
    %27 = vector.shape_cast %26 : vector<2x32xf32> to vector<2x32x1xf32>
    %28 = arith.addf %25, %27 : vector<2x32x1xf32>
    %c0_23 = arith.constant 0 : index
    %c0_24 = arith.constant 0 : index
    %c0_25 = arith.constant 0 : index
    %29 = vector.load %arg11[%c0_23, %c0_24, %c0_25] : memref<2x32x1xf32, #tpu.memory_space<vmem>>, vector<2x32x1xf32>
    tpu.vector_store %arg11[%c0_23, %c0_24, %c0_25], %28 {strides = array<i32>} : memref<2x32x1xf32, #tpu.memory_space<vmem>>, vector<2x32x1xf32>,
    %c0_26 = arith.constant 0 : index
    %c0_27 = arith.constant 0 : index
    %c0_28 = arith.constant 0 : index
    %30 = vector.load %arg12[%c0_26, %c0_27, %c0_28] : memref<2x32x64xf32, #tpu.memory_space<vmem>>, vector<2x32x64xf32>
    %31 = vector.broadcast %20 : vector<2x32x1xf32> to vector<2x32x64xf32>
    %32 = arith.mulf %31, %30 : vector<2x32x64xf32>
    %33 = arith.truncf %23 : vector<2x32x32xf32> to vector<2x32x32xbf16>
    "tpu.trace_start"() <{level = 10 : i32, message = "hqk,hkd->hqd"}> : () -> ()
    %cst_29 = arith.constant dense<0.000000e+00> : vector<2x32x64xf32>
    %34 = tpu.matmul %33, %13, %cst_29 {dimension_numbers = #tpu.dot_dimension_numbers<[2], [1], [1], [2], [0, 0, 0, 1, 1, 2], [0], [0]>} : vector<2x32x32xbf16>, vector<2x32x64xbf16>, vector<2x32x64xf32> -> vector<2x32x64xf32>
    "tpu.trace_stop"() : () -> ()
    %35 = arith.addf %32, %34 : vector<2x32x64xf32>
    %c0_30 = arith.constant 0 : index
    %c0_31 = arith.constant 0 : index
    %c0_32 = arith.constant 0 : index
    %36 = vector.load %arg12[%c0_30, %c0_31, %c0_32] : memref<2x32x64xf32, #tpu.memory_space<vmem>>, vector<2x32x64xf32>
    tpu.vector_store %arg12[%c0_30, %c0_31, %c0_32], %35 {strides = array<i32>} : memref<2x32x64xf32, #tpu.memory_space<vmem>>, vector<2x32x64xf32>,
    %c0_33 = arith.constant 0 : index
    %c0_34 = arith.constant 0 : index
    %c0_35 = arith.constant 0 : index
    %37 = vector.load %arg10[%c0_33, %c0_34, %c0_35] : memref<2x32x1xf32, #tpu.memory_space<vmem>>, vector<2x32x1xf32>
    tpu.vector_store %arg10[%c0_33, %c0_34, %c0_35], %18 {strides = array<i32>} : memref<2x32x1xf32, #tpu.memory_space<vmem>>, vector<2x32x1xf32>,
    %c1_i32 = arith.constant 1 : i32
    %38 = arith.cmpi eq, %arg3, %c1_i32 : i32
    %39 = arith.extui %38 : i1 to i32
    %c0_i32_36 = arith.constant 0 : i32
    %40 = arith.cmpi ne, %39, %c0_i32_36 : i32
    scf.if %40 {
      %c0_37 = arith.constant 0 : index
      %c0_38 = arith.constant 0 : index
      %c0_39 = arith.constant 0 : index
      %41 = vector.load %arg12[%c0_37, %c0_38, %c0_39] : memref<2x32x64xf32, #tpu.memory_space<vmem>>, vector<2x32x64xf32>
      %c0_40 = arith.constant 0 : index
      %c0_41 = arith.constant 0 : index
      %c0_42 = arith.constant 0 : index
      %42 = vector.load %arg11[%c0_40, %c0_41, %c0_42] : memref<2x32x1xf32, #tpu.memory_space<vmem>>, vector<2x32x1xf32>
      %43 = tpu.reciprocal %42 {approx = true} : vector<2x32x1xf32> -> vector<2x32x1xf32>
      %44 = vector.broadcast %43 : vector<2x32x1xf32> to vector<2x32x64xf32>
      %45 = arith.mulf %41, %44 : vector<2x32x64xf32>
      %46 = arith.truncf %45 : vector<2x32x64xf32> to vector<2x32x64xbf16>
      %c0_43 = arith.constant 0 : index
      %c0_44 = arith.constant 0 : index
      %47 = vector.load %arg13[%c0_43, %c0_44] : memref<32x32xf32, #tpu.memory_space<vmem>>, vector<32x32xf32>
      %48 = vector.extract_strided_slice %46 {offsets = [0, 0, 0], sizes = [1, 32, 64], strides = [1, 1, 1]} : vector<2x32x64xbf16> to vector<1x32x64xbf16>
      %49 = vector.shape_cast %48 : vector<1x32x64xbf16> to vector<32x64xbf16>
      %c2_i32 = arith.constant 2 : i32
      %50 = arith.muli %arg2, %c2_i32 : i32
      %c0_i32_45 = arith.constant 0 : i32
      %51 = arith.addi %50, %c0_i32_45 : i32
      %52 = arith.index_cast %51 : i32 to index
      %c0_46 = arith.constant 0 : index
      %c0_47 = arith.constant 0 : index
      %53 = vector.load %arg7[%52, %c0_46, %c0_47] : memref<4x64x32xbf16, #tpu.memory_space<vmem>>, vector<1x64x32xbf16>
      %54 = vector.shape_cast %53 : vector<1x64x32xbf16> to vector<64x32xbf16>
      %cst_48 = arith.constant dense<0.000000e+00> : vector<32x32xf32>
      %55 = tpu.matmul %49, %54, %cst_48 {dimension_numbers = #tpu.dot_dimension_numbers<[1], [0], [0], [1], [0, 0, 1, 1], [], []>} : vector<32x64xbf16>, vector<64x32xbf16>, vector<32x32xf32> -> vector<32x32xf32>
      %56 = arith.addf %47, %55 : vector<32x32xf32>
      %57 = vector.extract_strided_slice %46 {offsets = [1, 0, 0], sizes = [1, 32, 64], strides = [1, 1, 1]} : vector<2x32x64xbf16> to vector<1x32x64xbf16>
      %58 = vector.shape_cast %57 : vector<1x32x64xbf16> to vector<32x64xbf16>
      %c2_i32_49 = arith.constant 2 : i32
      %59 = arith.muli %arg2, %c2_i32_49 : i32
      %c1_i32_50 = arith.constant 1 : i32
      %60 = arith.addi %59, %c1_i32_50 : i32
      %61 = arith.index_cast %60 : i32 to index
      %c0_51 = arith.constant 0 : index
      %c0_52 = arith.constant 0 : index
      %62 = vector.load %arg7[%61, %c0_51, %c0_52] : memref<4x64x32xbf16, #tpu.memory_space<vmem>>, vector<1x64x32xbf16>
      %63 = vector.shape_cast %62 : vector<1x64x32xbf16> to vector<64x32xbf16>
      %cst_53 = arith.constant dense<0.000000e+00> : vector<32x32xf32>
      %64 = tpu.matmul %58, %63, %cst_53 {dimension_numbers = #tpu.dot_dimension_numbers<[1], [0], [0], [1], [0, 0, 1, 1], [], []>} : vector<32x64xbf16>, vector<64x32xbf16>, vector<32x32xf32> -> vector<32x32xf32>
      %65 = arith.addf %56, %64 : vector<32x32xf32>
      %c0_54 = arith.constant 0 : index
      %c0_55 = arith.constant 0 : index
      %66 = vector.load %arg13[%c0_54, %c0_55] : memref<32x32xf32, #tpu.memory_space<vmem>>, vector<32x32xf32>
      tpu.vector_store %arg13[%c0_54, %c0_55], %65 {strides = array<i32>} : memref<32x32xf32, #tpu.memory_space<vmem>>, vector<32x32xf32>,
      %c1_i32_56 = arith.constant 1 : i32
      %67 = arith.cmpi eq, %arg2, %c1_i32_56 : i32
      %68 = arith.extui %67 : i1 to i32
      %c0_i32_57 = arith.constant 0 : i32
      %69 = arith.cmpi ne, %68, %c0_i32_57 : i32
      scf.if %69 {
        %c0_58 = arith.constant 0 : index
        %c0_59 = arith.constant 0 : index
        %70 = vector.load %arg13[%c0_58, %c0_59] : memref<32x32xf32, #tpu.memory_space<vmem>>, vector<32x32xf32>
        %c0_60 = arith.constant 0 : index
        %c0_61 = arith.constant 0 : index
        %71 = vector.load %arg8[%c0_60, %c0_61] : memref<1x32xf32, #tpu.memory_space<vmem>>, vector<1x32xf32>
        %72 = vector.broadcast %71 : vector<1x32xf32> to vector<32x32xf32>
        %73 = arith.addf %70, %72 : vector<32x32xf32>
        %c0_62 = arith.constant 0 : index
        %c0_63 = arith.constant 0 : index
        %c0_64 = arith.constant 0 : index
        %74 = vector.load %arg9[%c0_62, %c0_63, %c0_64] : memref<1x32x32xf32, #tpu.memory_space<vmem>>, vector<1x32x32xf32>
        %75 = vector.shape_cast %74 : vector<1x32x32xf32> to vector<32x32xf32>
        %76 = vector.shape_cast %73 : vector<32x32xf32> to vector<1x32x32xf32>
        tpu.vector_store %arg9[%c0_62, %c0_63, %c0_64], %76 {strides = array<i32>} : memref<1x32x32xf32, #tpu.memory_space<vmem>>, vector<1x32x32xf32>,
      } else {
      }
    } else {
    }
    return
  }
  func.func @transform_0(%arg0: i32, %arg1: i32, %arg2: i32, %arg3: i32) -> (i32, i32, i32, i32) {
    %c0_i32 = arith.constant 0 : i32
    %c0_i32_0 = arith.constant 0 : i32
    return %arg0, %arg2, %arg1, %c0_i32 : i32, i32, i32, i32
  }
  func.func @transform_1(%arg0: i32, %arg1: i32, %arg2: i32, %arg3: i32) -> (i32, i32, i32, i32) {
    %c0_i32 = arith.constant 0 : i32
    %c0_i32_0 = arith.constant 0 : i32
    return %arg0, %arg2, %arg3, %c0_i32 : i32, i32, i32, i32
  }
  func.func @transform_2(%arg0: i32, %arg1: i32, %arg2: i32, %arg3: i32) -> (i32, i32, i32, i32) {
    %c0_i32 = arith.constant 0 : i32
    %c0_i32_0 = arith.constant 0 : i32
    return %arg0, %arg2, %arg3, %c0_i32 : i32, i32, i32, i32
  }
  func.func @transform_3(%arg0: i32, %arg1: i32, %arg2: i32, %arg3: i32) -> (i32, i32, i32) {
    %c0_i32 = arith.constant 0 : i32
    %c0_i32_0 = arith.constant 0 : i32
    %c0_i32_1 = arith.constant 0 : i32
    %c0_i32_2 = arith.constant 0 : i32
    return %c0_i32, %c0_i32_0, %c0_i32_1 : i32, i32, i32
  }
  func.func @transform_4(%arg0: i32, %arg1: i32, %arg2: i32, %arg3: i32) -> (i32, i32) {
    %c0_i32 = arith.constant 0 : i32
    %c0_i32_0 = arith.constant 0 : i32
    %c0_i32_1 = arith.constant 0 : i32
    return %c0_i32, %c0_i32_0 : i32, i32
  }
  func.func @transform_5(%arg0: i32, %arg1: i32, %arg2: i32, %arg3: i32) -> (i32, i32, i32) {
    %c0_i32 = arith.constant 0 : i32
    %c0_i32_0 = arith.constant 0 : i32
    return %arg0, %arg1, %c0_i32 : i32, i32, i32
  }
}

</mosaic_0001>

<llo_original>
// kernel: attention_forward.1
$region0: #{attention_forward.1}
  #allocation0 [shape = 'u32[]', space=smem, size = 0x4, offset = 0x4, fixed_abs, tag = 'smem constant byte address 0x4 - core index']
  #allocation1 [shape = 'u32[72,128]{1,0:T(1,128)}', space=vmem, size = 0x9000, scoped, tag = 'internal scratch']
  #allocation2 [shape = 'f32[2,32,1]{2,1,0:T(8,128)}', space=vmem, size = 0x8000, scoped, tag = 'scratch operand']
  #allocation3 [shape = 'f32[2,32,1]{2,1,0:T(8,128)}', space=vmem, size = 0x8000, scoped, tag = 'scratch operand']
  #allocation4 [shape = 'f32[2,32,64]{2,1,0:T(8,128)}', space=vmem, size = 0x8000, scoped, tag = 'scratch operand']
  #allocation5 [shape = 'f32[32,32]{1,0:T(8,128)}', space=vmem, size = 0x4000, scoped, tag = 'scratch operand']
  %s0 = inlined_call_operand.vmem [shape: bf16[2,4,64,64], index: 0, kind: input, shape index: {}]
  %s1 = inlined_call_operand.vmem [shape: bf16[2,4,64,64], index: 1, kind: input, shape index: {}]
  %s2 = inlined_call_operand.vmem [shape: bf16[2,4,64,64], index: 2, kind: input, shape index: {}]
  %s3 = inlined_call_operand.vmem [shape: bf16[4,64,32], index: 3, kind: input, shape index: {}]
  %s4 = inlined_call_operand.vmem [shape: f32[1,32], index: 4, kind: input, shape index: {}]
  %s5 = inlined_call_operand.vmem [shape: f32[2,64,32], index: 5, kind: output, shape index: {}]
  %s6 = sld [smem:[#allocation0]]
  $region192: #{attention_forward.1} parent=0
    _
  %s8 = ssub.s32 1, %s6
  %s9 = scalar_select 0, %s8, %s6
  $region1: #{attention_forward.1} parent=0
    #allocation6 [shape = 'u8[32768]{0}', space=vmem, size = 0x8000, scoped, tag = 'input window, operand 0']
    #allocation7 [shape = 'u8[32768]{0}', space=vmem, size = 0x8000, scoped, tag = 'input window, operand 1']
    #allocation8 [shape = 'u8[32768]{0}', space=vmem, size = 0x8000, scoped, tag = 'input window, operand 2']
    loop: start=0, step=1, limit=18
    $region2: #{attention_forward.1} parent=1 // loop_pre_header
      _
    $region3: #{attention_forward.1} parent=1 // loop_header
      %s11 = sphi 0, %s15
      %p12 = scmp.ge.s32.totalorder %s11, 18
      %s18 = sphi 0, %s44
      %s19 = sphi 0, %s40
      %s20 = sphi 0, %s36
      %s21 = sphi 0, %s32
      %s22 = sphi 0, %s18
      %s23 = sphi 0, %s19
      %s24 = sphi 0, %s20
      %s25 = sphi 0, %s21
      %s26 = sphi 0, %s22
      %s27 = sphi 0, %s23
      %s28 = sphi 0, %s24
      %s29 = sphi 0, %s25
      %s51 = sphi 0, %s53
      %s54 = sphi 0, %s51
      %s55 = sphi 0, %s54
      %s71 = sphi 0, %s55
      %s81 = sphi 0, %s83
      %s84 = sphi 0, %s81
      %s85 = sphi 0, %s84
      %s101 = sphi 0, %s85
      %s111 = sphi 0, %s113
      %s114 = sphi 0, %s111
      %s115 = sphi 0, %s114
      %s131 = sphi 0, %s115
      %s135 = sphi 0, %s135
      %s137 = sphi 0, %s135
      %s138 = sphi 0, %s137
      %s152 = sphi 0, %s138
      %s156 = sphi 0, %s156
      %s158 = sphi 0, %s156
      %s159 = sphi 0, %s158
      %s173 = sphi 0, %s159
      %s181 = sphi 0, %s183
      %s184 = sphi 0, %s181
      %s185 = sphi 0, %s184
      %s201 = sphi 0, %s185
    $region4: #{attention_forward.1} parent=1 // loop_header_branch
      %14 = sbr.rel (%p12) target = $region8
    $region5: #{attention_forward.1} parent=1 // loop_body
      %s16 = ssub.s32 %s11, 1
      %s17 = ssub.s32 %s11, 2
      %s30 = sadd.s32 1, %s21
      %p31 = scmp.ge.s32.totalorder %s30, 2
      %s32 = scalar_select %p31, 0, %s30
      %s33 = sadd.s32 1, %s20
      %s34 = scalar_select %p31, %s33, %s20
      %p35 = scmp.ge.s32.totalorder %s34, 2
      %s36 = scalar_select %p35, 0, %s34
      %s37 = sadd.s32 1, %s19
      %s38 = scalar_select %p35, %s37, %s19
      %p39 = scmp.ge.s32.totalorder %s38, 2
      %s40 = scalar_select %p39, 0, %s38
      %s41 = sadd.s32 1, %s18
      %s42 = scalar_select %p39, %s41, %s18
      %p43 = scmp.ge.s32.totalorder %s42, 2
      %s44 = scalar_select %p43, 0, %s42
      %s45 = ssub.s32 %s18, %s44
      %s46 = ssub.s32 %s20, %s36
      %s47 = sor.u32 %s45, %s46
      %s48 = ssub.s32 %s19, %s40
      %s49 = sor.u32 %s47, %s48
      %p50 = scmp.eq.s32.totalorder %s49, 0
      %s52 = sadd.s32 %s51, 1
      %s53 = scalar_select %p50, %s51, %s52
      %p56 = pneg %p50
      %p57 = scmp.eq.s32.totalorder %s11, 15
      %p58 = por %p56, %p57
      %p59 = scmp.ne.s32.totalorder %s51, %s54
      %p60 = scmp.eq.s32.totalorder %s11, 0
      %p61 = por %p59, %p60
      %p62 = scmp.ne.s32.totalorder %s51, %s54
      %p63 = scmp.eq.s32.totalorder %s16, 15
      %p64 = por %p62, %p63
      %p65 = scmp.ne.s32.totalorder %s54, %s55
      %p66 = scmp.eq.s32.totalorder %s16, 0
      %p67 = por %p65, %p66
      %p68 = scmp.ne.s32.totalorder %s54, %s55
      %p69 = scmp.eq.s32.totalorder %s17, 15
      %p70 = por %p68, %p69
      %p72 = scmp.ne.s32.totalorder %s55, %s71
      %p73 = scmp.eq.s32.totalorder %s17, 0
      %p74 = por %p72, %p73
      %s75 = ssub.s32 %s18, %s44
      %s76 = ssub.s32 %s20, %s36
      %s77 = sor.u32 %s75, %s76
      %s78 = ssub.s32 %s21, %s32
      %s79 = sor.u32 %s77, %s78
      %p80 = scmp.eq.s32.totalorder %s79, 0
      %s82 = sadd.s32 %s81, 1
      %s83 = scalar_select %p80, %s81, %s82
      %p86 = pneg %p80
      %p87 = scmp.eq.s32.totalorder %s11, 15
      %p88 = por %p86, %p87
      %p89 = scmp.ne.s32.totalorder %s81, %s84
      %p90 = scmp.eq.s32.totalorder %s11, 0
      %p91 = por %p89, %p90
      %p92 = scmp.ne.s32.totalorder %s81, %s84
      %p93 = scmp.eq.s32.totalorder %s16, 15
      %p94 = por %p92, %p93
      %p95 = scmp.ne.s32.totalorder %s84, %s85
      %p96 = scmp.eq.s32.totalorder %s16, 0
      %p97 = por %p95, %p96
      %p98 = scmp.ne.s32.totalorder %s84, %s85
      %p99 = scmp.eq.s32.totalorder %s17, 15
      %p100 = por %p98, %p99
      %p102 = scmp.ne.s32.totalorder %s85, %s101
      %p103 = scmp.eq.s32.totalorder %s17, 0
      %p104 = por %p102, %p103
      %s105 = ssub.s32 %s18, %s44
      %s106 = ssub.s32 %s20, %s36
      %s107 = sor.u32 %s105, %s106
      %s108 = ssub.s32 %s21, %s32
      %s109 = sor.u32 %s107, %s108
      %p110 = scmp.eq.s32.totalorder %s109, 0
      %s112 = sadd.s32 %s111, 1
      %s113 = scalar_select %p110, %s111, %s112
      %p116 = pneg %p110
      %p117 = scmp.eq.s32.totalorder %s11, 15
      %p118 = por %p116, %p117
      %p119 = scmp.ne.s32.totalorder %s111, %s114
      %p120 = scmp.eq.s32.totalorder %s11, 0
      %p121 = por %p119, %p120
      %p122 = scmp.ne.s32.totalorder %s111, %s114
      %p123 = scmp.eq.s32.totalorder %s16, 15
      %p124 = por %p122, %p123
      %p125 = scmp.ne.s32.totalorder %s114, %s115
      %p126 = scmp.eq.s32.totalorder %s16, 0
      %p127 = por %p125, %p126
      %p128 = scmp.ne.s32.totalorder %s114, %s115
      %p129 = scmp.eq.s32.totalorder %s17, 15
      %p130 = por %p128, %p129
      %p132 = scmp.ne.s32.totalorder %s115, %s131
      %p133 = scmp.eq.s32.totalorder %s17, 0
      %p134 = por %p132, %p133
      %s136 = sadd.s32 %s135, 1
      %p139 = scmp.eq.s32.totalorder %s11, 15
      %p140 = scmp.ne.s32.totalorder %s135, %s137
      %p141 = scmp.eq.s32.totalorder %s11, 0
      %p142 = por %p140, %p141
      %p143 = scmp.ne.s32.totalorder %s135, %s137
      %p144 = scmp.eq.s32.totalorder %s16, 15
      %p145 = por %p143, %p144
      %p146 = scmp.ne.s32.totalorder %s137, %s138
      %p147 = scmp.eq.s32.totalorder %s16, 0
      %p148 = por %p146, %p147
      %p149 = scmp.ne.s32.totalorder %s137, %s138
      %p150 = scmp.eq.s32.totalorder %s17, 15
      %p151 = por %p149, %p150
      %p153 = scmp.ne.s32.totalorder %s138, %s152
      %p154 = scmp.eq.s32.totalorder %s17, 0
      %p155 = por %p153, %p154
      %s157 = sadd.s32 %s156, 1
      %p160 = scmp.eq.s32.totalorder %s11, 15
      %p161 = scmp.ne.s32.totalorder %s156, %s158
      %p162 = scmp.eq.s32.totalorder %s11, 0
      %p163 = por %p161, %p162
      %p164 = scmp.ne.s32.totalorder %s156, %s158
      %p165 = scmp.eq.s32.totalorder %s16, 15
      %p166 = por %p164, %p165
      %p167 = scmp.ne.s32.totalorder %s158, %s159
      %p168 = scmp.eq.s32.totalorder %s16, 0
      %p169 = por %p167, %p168
      %p170 = scmp.ne.s32.totalorder %s158, %s159
      %p171 = scmp.eq.s32.totalorder %s17, 15
      %p172 = por %p170, %p171
      %p174 = scmp.ne.s32.totalorder %s159, %s173
      %p175 = scmp.eq.s32.totalorder %s17, 0
      %p176 = por %p174, %p175
      %s177 = ssub.s32 %s18, %s44
      %s178 = ssub.s32 %s19, %s40
      %s179 = sor.u32 %s177, %s178
      %p180 = scmp.eq.s32.totalorder %s179, 0
      %s182 = sadd.s32 %s181, 1
      %s183 = scalar_select %p180, %s181, %s182
      %p186 = pneg %p180
      %p187 = scmp.eq.s32.totalorder %s11, 15
      %p188 = por %p186, %p187
      %p189 = scmp.ne.s32.totalorder %s181, %s184
      %p190 = scmp.eq.s32.totalorder %s11, 0
      %p191 = por %p189, %p190
      %p192 = scmp.ne.s32.totalorder %s181, %s184
      %p193 = scmp.eq.s32.totalorder %s16, 15
      %p194 = por %p192, %p193
      %p195 = scmp.ne.s32.totalorder %s184, %s185
      %p196 = scmp.eq.s32.totalorder %s16, 0
      %p197 = por %p195, %p196
      %p198 = scmp.ne.s32.totalorder %s184, %s185
      %p199 = scmp.eq.s32.totalorder %s17, 15
      %p200 = por %p198, %p199
      %p202 = scmp.ne.s32.totalorder %s185, %s201
      %p203 = scmp.eq.s32.totalorder %s17, 0
      %p204 = por %p202, %p203
      %p205 = scmp.le.s32.totalorder 1, %s11
      %p206 = scmp.lt.s32.totalorder %s11, 17
      %p207 = pnand %p205, %p206
      %p208 = pneg %p207
      // Predicated region
      $region9: #{attention_forward.1} parent=5 // pred_check
        _
      $region10: #{attention_forward.1} parent=5 // pred_check_branch
        %210 = sbr.rel (%p207) target = $region12
      $region11: #{attention_forward.1} parent=5 // pred_region
        %s211 = ssub.s32 %s11, 1
        // Predicated region
        $region13: #{attention_forward.1} parent=11 // pred_check
          %p212 = pneg %p148
        $region14: #{attention_forward.1} parent=11 // pred_check_branch
          %214 = sbr.rel (%p212) target = $region16
        $region15: #{attention_forward.1} parent=11 // pred_region
          _
        $region16: #{attention_forward.1} parent=11 // pred_fallthru
          _
        // Predicated region
        $region17: #{attention_forward.1} parent=11 // pred_check
          %p215 = pneg %p169
        $region18: #{attention_forward.1} parent=11 // pred_check_branch
          %217 = sbr.rel (%p215) target = $region20
        $region19: #{attention_forward.1} parent=11 // pred_region
          _
        $region20: #{attention_forward.1} parent=11 // pred_fallthru
          _
      $region12: #{attention_forward.1} parent=5 // pred_fallthru
        _
      %p218 = scmp.lt.s32.totalorder %s11, 16
      // Predicated region
      $region21: #{attention_forward.1} parent=5 // pred_check
        %p219 = pneg %p218
      $region22: #{attention_forward.1} parent=5 // pred_check_branch
        %221 = sbr.rel (%p219) target = $region24
      $region23: #{attention_forward.1} parent=5 // pred_region
        // Predicated region
        $region25: #{attention_forward.1} parent=23 // pred_check
          %p222 = pneg %p61
        $region26: #{attention_forward.1} parent=23 // pred_check_branch
          %224 = sbr.rel (%p222) target = $region28
        $region27: #{attention_forward.1} parent=23 // pred_region
          %s225 = sand.u32 %s51, 1
          %s226 = sand.u32 %s51, 1
          %s227 = smul.addr %s226, 32
          %s228 = scalar_lea.vmem [#allocation6], %s227
          %s229 = smul.u32 2, %s20
          %s230 = smul.u32 4, %s19
          %s231 = smul.addr %s229, 8
          %s232 = sadd.s32 %s230, %s231
          %s233 = smul.addr %s18, 32
          %s234 = sadd.s32 %s232, %s233
          %s235 = smul.addr %s234, 4
          %s236 = scalar_lea.vmem %s0, %s235
          // Predicated region
          $region29: #{attention_forward.1} parent=27 // pred_check
            _
          $region30: #{attention_forward.1} parent=27 // pred_check_branch
            %238 = sbr.rel (0) target = $region32
          $region31: #{attention_forward.1} parent=27 // pred_region
            // Predicated region
            $region33: #{attention_forward.1} parent=31 // pred_check
              _
            $region34: #{attention_forward.1} parent=31 // pred_check_branch
              %240 = sbr.rel target = $region36
            $region35: #{attention_forward.1} parent=31 // pred_region
              // Predicated region
              $region48: #{attention_forward.1} parent=35 // pred_check
                _
              $region49: #{attention_forward.1} parent=35 // pred_check_branch
                %270 = sbr.rel (0) target = $region51
              $region50: #{attention_forward.1} parent=35 // pred_region
                loop: start=0, step=1, limit=1
                $region52: #{attention_forward.1} parent=50 // loop_pre_header
                  _
                $region53: #{attention_forward.1} parent=50 // loop_header
                  %s272 = sphi 0, %s276
                  %p273 = scmp.ge.s32.totalorder %s272, 1
                  %s277 = sphi %s236, %s236
                  %s278 = sphi %s228, %s228
                $region54: #{attention_forward.1} parent=50 // loop_header_branch
                  %275 = sbr.rel (%p273) target = $region58
                $region55: #{attention_forward.1} parent=50 // loop_body
                  _
                $region56: #{attention_forward.1} parent=50 // loop_footer
                  %s276 = sadd.s32 1, %s272
                $region57: #{attention_forward.1} parent=50 // loop_footer_branch
                  %271 = sbr.rel target = $region53
                $region58: #{attention_forward.1} parent=50 // loop_exit
                  _
                %s280 = ssub.s32 16, 1
                loop: start=0, step=1, limit=1
                $region59: #{attention_forward.1} parent=50 // loop_pre_header
                  _
                $region60: #{attention_forward.1} parent=50 // loop_header
                  %s282 = sphi 0, %s286
                  %p283 = scmp.ge.s32.totalorder %s282, 1
                  %s287 = sphi %s236, %s236
                  %s288 = sphi %s228, %s228
                $region61: #{attention_forward.1} parent=50 // loop_header_branch
                  %285 = sbr.rel (%p283) target = $region65
                $region62: #{attention_forward.1} parent=50 // loop_body
                  %v289 = vld [vmem:[%s287] sm:%s280]
                  %290 = vst [vmem:[%s288] sm:%s280] %v289
                  %v291 = vld [vmem:[%s287 + $0x4] sm:%s280]
                  %292 = vst [vmem:[%s288 + $0x4] sm:%s280] %v291
                  %v293 = vld [vmem:[%s287 + $0x8] sm:%s280]
                  %294 = vst [vmem:[%s288 + $0x8] sm:%s280] %v293
                  %v295 = vld [vmem:[%s287 + $0xc] sm:%s280]
                  %296 = vst [vmem:[%s288 + $0xc] sm:%s280] %v295
                  %v297 = vld [vmem:[%s287 + $0x20] sm:%s280]
                  %298 = vst [vmem:[%s288 + $0x10] sm:%s280] %v297
                  %v299 = vld [vmem:[%s287 + $0x24] sm:%s280]
                  %300 = vst [vmem:[%s288 + $0x14] sm:%s280] %v299
                  %v301 = vld [vmem:[%s287 + $0x28] sm:%s280]
                  %302 = vst [vmem:[%s288 + $0x18] sm:%s280] %v301
                  %v303 = vld [vmem:[%s287 + $0x2c] sm:%s280]
                  %304 = vst [vmem:[%s288 + $0x1c] sm:%s280] %v303
                $region63: #{attention_forward.1} parent=50 // loop_footer
                  %s286 = sadd.s32 1, %s282
                $region64: #{attention_forward.1} parent=50 // loop_footer_branch
                  %281 = sbr.rel target = $region60
                $region65: #{attention_forward.1} parent=50 // loop_exit
                  _
              $region51: #{attention_forward.1} parent=35 // pred_fallthru
                _
            $region36: #{attention_forward.1} parent=31 // pred_fallthru
              _
            // Predicated region
            $region37: #{attention_forward.1} parent=31 // pred_check
              _
            $region38: #{attention_forward.1} parent=31 // pred_check_branch
              %242 = sbr.rel (0) target = $region40
            $region39: #{attention_forward.1} parent=31 // pred_region
              %s244 = ssub.s32 16, 1
              loop: start=0, step=1, limit=1
              $region41: #{attention_forward.1} parent=39 // loop_pre_header
                _
              $region42: #{attention_forward.1} parent=39 // loop_header
                %s246 = sphi 0, %s250
                %p247 = scmp.ge.s32.totalorder %s246, 1
                %s251 = sphi %s236, %s236
                %s252 = sphi %s228, %s228
              $region43: #{attention_forward.1} parent=39 // loop_header_branch
                %249 = sbr.rel (%p247) target = $region47
              $region44: #{attention_forward.1} parent=39 // loop_body
                %v253 = vld [vmem:[%s251] sm:%s244]
                %254 = vst [vmem:[%s252] sm:%s244] %v253
                %v255 = vld [vmem:[%s251 + $0x4] sm:%s244]
                %256 = vst [vmem:[%s252 + $0x4] sm:%s244] %v255
                %v257 = vld [vmem:[%s251 + $0x8] sm:%s244]
                %258 = vst [vmem:[%s252 + $0x8] sm:%s244] %v257
                %v259 = vld [vmem:[%s251 + $0xc] sm:%s244]
                %260 = vst [vmem:[%s252 + $0xc] sm:%s244] %v259
                %v261 = vld [vmem:[%s251 + $0x20] sm:%s244]
                %262 = vst [vmem:[%s252 + $0x10] sm:%s244] %v261
                %v263 = vld [vmem:[%s251 + $0x24] sm:%s244]
                %264 = vst [vmem:[%s252 + $0x14] sm:%s244] %v263
                %v265 = vld [vmem:[%s251 + $0x28] sm:%s244]
                %266 = vst [vmem:[%s252 + $0x18] sm:%s244] %v265
                %v267 = vld [vmem:[%s251 + $0x2c] sm:%s244]
                %268 = vst [vmem:[%s252 + $0x1c] sm:%s244] %v267
              $region45: #{attention_forward.1} parent=39 // loop_footer
                %s250 = sadd.s32 1, %s246
              $region46: #{attention_forward.1} parent=39 // loop_footer_branch
                %245 = sbr.rel target = $region42
              $region47: #{attention_forward.1} parent=39 // loop_exit
                _
            $region40: #{attention_forward.1} parent=31 // pred_fallthru
              _
          $region32: #{attention_forward.1} parent=27 // pred_fallthru
            _
          %305 = vnop
        $region28: #{attention_forward.1} parent=23 // pred_fallthru
          _
        // Predicated region
        $region66: #{attention_forward.1} parent=23 // pred_check
          %p306 = pneg %p91
        $region67: #{attention_forward.1} parent=23 // pred_check_branch
          %308 = sbr.rel (%p306) target = $region69
        $region68: #{attention_forward.1} parent=23 // pred_region
          %s309 = sand.u32 %s81, 1
          %s310 = sand.u32 %s81, 1
          %s311 = smul.addr %s310, 32
          %s312 = scalar_lea.vmem [#allocation7], %s311
          %s313 = smul.u32 2, %s20
          %s314 = smul.u32 4, %s21
          %s315 = smul.addr %s313, 8
          %s316 = sadd.s32 %s314, %s315
          %s317 = smul.addr %s18, 32
          %s318 = sadd.s32 %s316, %s317
          %s319 = smul.addr %s318, 4
          %s320 = scalar_lea.vmem %s1, %s319
          // Predicated region
          $region70: #{attention_forward.1} parent=68 // pred_check
            _
          $region71: #{attention_forward.1} parent=68 // pred_check_branch
            %322 = sbr.rel (0) target = $region73
          $region72: #{attention_forward.1} parent=68 // pred_region
            // Predicated region
            $region74: #{attention_forward.1} parent=72 // pred_check
              _
            $region75: #{attention_forward.1} parent=72 // pred_check_branch
              %324 = sbr.rel target = $region77
            $region76: #{attention_forward.1} parent=72 // pred_region
              // Predicated region
              $region89: #{attention_forward.1} parent=76 // pred_check
                _
              $region90: #{attention_forward.1} parent=76 // pred_check_branch
                %354 = sbr.rel (0) target = $region92
              $region91: #{attention_forward.1} parent=76 // pred_region
                loop: start=0, step=1, limit=1
                $region93: #{attention_forward.1} parent=91 // loop_pre_header
                  _
                $region94: #{attention_forward.1} parent=91 // loop_header
                  %s356 = sphi 0, %s360
                  %p357 = scmp.ge.s32.totalorder %s356, 1
                  %s361 = sphi %s320, %s320
                  %s362 = sphi %s312, %s312
                $region95: #{attention_forward.1} parent=91 // loop_header_branch
                  %359 = sbr.rel (%p357) target = $region99
                $region96: #{attention_forward.1} parent=91 // loop_body
                  _
                $region97: #{attention_forward.1} parent=91 // loop_footer
                  %s360 = sadd.s32 1, %s356
                $region98: #{attention_forward.1} parent=91 // loop_footer_branch
                  %355 = sbr.rel target = $region94
                $region99: #{attention_forward.1} parent=91 // loop_exit
                  _
                %s364 = ssub.s32 16, 1
                loop: start=0, step=1, limit=1
                $region100: #{attention_forward.1} parent=91 // loop_pre_header
                  _
                $region101: #{attention_forward.1} parent=91 // loop_header
                  %s366 = sphi 0, %s370
                  %p367 = scmp.ge.s32.totalorder %s366, 1
                  %s371 = sphi %s320, %s320
                  %s372 = sphi %s312, %s312
                $region102: #{attention_forward.1} parent=91 // loop_header_branch
                  %369 = sbr.rel (%p367) target = $region106
                $region103: #{attention_forward.1} parent=91 // loop_body
                  %v373 = vld [vmem:[%s371] sm:%s364]
                  %374 = vst [vmem:[%s372] sm:%s364] %v373
                  %v375 = vld [vmem:[%s371 + $0x4] sm:%s364]
                  %376 = vst [vmem:[%s372 + $0x4] sm:%s364] %v375
                  %v377 = vld [vmem:[%s371 + $0x8] sm:%s364]
                  %378 = vst [vmem:[%s372 + $0x8] sm:%s364] %v377
                  %v379 = vld [vmem:[%s371 + $0xc] sm:%s364]
                  %380 = vst [vmem:[%s372 + $0xc] sm:%s364] %v379
                  %v381 = vld [vmem:[%s371 + $0x20] sm:%s364]
                  %382 = vst [vmem:[%s372 + $0x10] sm:%s364] %v381
                  %v383 = vld [vmem:[%s371 + $0x24] sm:%s364]
                  %384 = vst [vmem:[%s372 + $0x14] sm:%s364] %v383
                  %v385 = vld [vmem:[%s371 + $0x28] sm:%s364]
                  %386 = vst [vmem:[%s372 + $0x18] sm:%s364] %v385
                  %v387 = vld [vmem:[%s371 + $0x2c] sm:%s364]
                  %388 = vst [vmem:[%s372 + $0x1c] sm:%s364] %v387
                $region104: #{attention_forward.1} parent=91 // loop_footer
                  %s370 = sadd.s32 1, %s366
                $region105: #{attention_forward.1} parent=91 // loop_footer_branch
                  %365 = sbr.rel target = $region101
                $region106: #{attention_forward.1} parent=91 // loop_exit
                  _
              $region92: #{attention_forward.1} parent=76 // pred_fallthru
                _
            $region77: #{attention_forward.1} parent=72 // pred_fallthru
              _
            // Predicated region
            $region78: #{attention_forward.1} parent=72 // pred_check
              _
            $region79: #{attention_forward.1} parent=72 // pred_check_branch
              %326 = sbr.rel (0) target = $region81
            $region80: #{attention_forward.1} parent=72 // pred_region
              %s328 = ssub.s32 16, 1
              loop: start=0, step=1, limit=1
              $region82: #{attention_forward.1} parent=80 // loop_pre_header
                _
              $region83: #{attention_forward.1} parent=80 // loop_header
                %s330 = sphi 0, %s334
                %p331 = scmp.ge.s32.totalorder %s330, 1
                %s335 = sphi %s320, %s320
                %s336 = sphi %s312, %s312
              $region84: #{attention_forward.1} parent=80 // loop_header_branch
                %333 = sbr.rel (%p331) target = $region88
              $region85: #{attention_forward.1} parent=80 // loop_body
                %v337 = vld [vmem:[%s335] sm:%s328]
                %338 = vst [vmem:[%s336] sm:%s328] %v337
                %v339 = vld [vmem:[%s335 + $0x4] sm:%s328]
                %340 = vst [vmem:[%s336 + $0x4] sm:%s328] %v339
                %v341 = vld [vmem:[%s335 + $0x8] sm:%s328]
                %342 = vst [vmem:[%s336 + $0x8] sm:%s328] %v341
                %v343 = vld [vmem:[%s335 + $0xc] sm:%s328]
                %344 = vst [vmem:[%s336 + $0xc] sm:%s328] %v343
                %v345 = vld [vmem:[%s335 + $0x20] sm:%s328]
                %346 = vst [vmem:[%s336 + $0x10] sm:%s328] %v345
                %v347 = vld [vmem:[%s335 + $0x24] sm:%s328]
                %348 = vst [vmem:[%s336 + $0x14] sm:%s328] %v347
                %v349 = vld [vmem:[%s335 + $0x28] sm:%s328]
                %350 = vst [vmem:[%s336 + $0x18] sm:%s328] %v349
                %v351 = vld [vmem:[%s335 + $0x2c] sm:%s328]
                %352 = vst [vmem:[%s336 + $0x1c] sm:%s328] %v351
              $region86: #{attention_forward.1} parent=80 // loop_footer
                %s334 = sadd.s32 1, %s330
              $region87: #{attention_forward.1} parent=80 // loop_footer_branch
                %329 = sbr.rel target = $region83
              $region88: #{attention_forward.1} parent=80 // loop_exit
                _
            $region81: #{attention_forward.1} parent=72 // pred_fallthru
              _
          $region73: #{attention_forward.1} parent=68 // pred_fallthru
            _
          %389 = vnop
        $region69: #{attention_forward.1} parent=23 // pred_fallthru
          _
        // Predicated region
        $region107: #{attention_forward.1} parent=23 // pred_check
          %p390 = pneg %p121
        $region108: #{attention_forward.1} parent=23 // pred_check_branch
          %392 = sbr.rel (%p390) target = $region110
        $region109: #{attention_forward.1} parent=23 // pred_region
          %s393 = sand.u32 %s111, 1
          %s394 = sand.u32 %s111, 1
          %s395 = smul.addr %s394, 32
          %s396 = scalar_lea.vmem [#allocation8], %s395
          %s397 = smul.u32 2, %s20
          %s398 = smul.u32 4, %s21
          %s399 = smul.addr %s397, 8
          %s400 = sadd.s32 %s398, %s399
          %s401 = smul.addr %s18, 32
          %s402 = sadd.s32 %s400, %s401
          %s403 = smul.addr %s402, 4
          %s404 = scalar_lea.vmem %s2, %s403
          // Predicated region
          $region111: #{attention_forward.1} parent=109 // pred_check
            _
          $region112: #{attention_forward.1} parent=109 // pred_check_branch
            %406 = sbr.rel (0) target = $region114
          $region113: #{attention_forward.1} parent=109 // pred_region
            // Predicated region
            $region115: #{attention_forward.1} parent=113 // pred_check
              _
            $region116: #{attention_forward.1} parent=113 // pred_check_branch
              %408 = sbr.rel target = $region118
            $region117: #{attention_forward.1} parent=113 // pred_region
              // Predicated region
              $region130: #{attention_forward.1} parent=117 // pred_check
                _
              $region131: #{attention_forward.1} parent=117 // pred_check_branch
                %438 = sbr.rel (0) target = $region133
              $region132: #{attention_forward.1} parent=117 // pred_region
                loop: start=0, step=1, limit=1
                $region134: #{attention_forward.1} parent=132 // loop_pre_header
                  _
                $region135: #{attention_forward.1} parent=132 // loop_header
                  %s440 = sphi 0, %s444
                  %p441 = scmp.ge.s32.totalorder %s440, 1
                  %s445 = sphi %s404, %s404
                  %s446 = sphi %s396, %s396
                $region136: #{attention_forward.1} parent=132 // loop_header_branch
                  %443 = sbr.rel (%p441) target = $region140
                $region137: #{attention_forward.1} parent=132 // loop_body
                  _
                $region138: #{attention_forward.1} parent=132 // loop_footer
                  %s444 = sadd.s32 1, %s440
                $region139: #{attention_forward.1} parent=132 // loop_footer_branch
                  %439 = sbr.rel target = $region135
                $region140: #{attention_forward.1} parent=132 // loop_exit
                  _
                %s448 = ssub.s32 16, 1
                loop: start=0, step=1, limit=1
                $region141: #{attention_forward.1} parent=132 // loop_pre_header
                  _
                $region142: #{attention_forward.1} parent=132 // loop_header
                  %s450 = sphi 0, %s454
                  %p451 = scmp.ge.s32.totalorder %s450, 1
                  %s455 = sphi %s404, %s404
                  %s456 = sphi %s396, %s396
                $region143: #{attention_forward.1} parent=132 // loop_header_branch
                  %453 = sbr.rel (%p451) target = $region147
                $region144: #{attention_forward.1} parent=132 // loop_body
                  %v457 = vld [vmem:[%s455] sm:%s448]
                  %458 = vst [vmem:[%s456] sm:%s448] %v457
                  %v459 = vld [vmem:[%s455 + $0x4] sm:%s448]
                  %460 = vst [vmem:[%s456 + $0x4] sm:%s448] %v459
                  %v461 = vld [vmem:[%s455 + $0x8] sm:%s448]
                  %462 = vst [vmem:[%s456 + $0x8] sm:%s448] %v461
                  %v463 = vld [vmem:[%s455 + $0xc] sm:%s448]
                  %464 = vst [vmem:[%s456 + $0xc] sm:%s448] %v463
                  %v465 = vld [vmem:[%s455 + $0x20] sm:%s448]
                  %466 = vst [vmem:[%s456 + $0x10] sm:%s448] %v465
                  %v467 = vld [vmem:[%s455 + $0x24] sm:%s448]
                  %468 = vst [vmem:[%s456 + $0x14] sm:%s448] %v467
                  %v469 = vld [vmem:[%s455 + $0x28] sm:%s448]
                  %470 = vst [vmem:[%s456 + $0x18] sm:%s448] %v469
                  %v471 = vld [vmem:[%s455 + $0x2c] sm:%s448]
                  %472 = vst [vmem:[%s456 + $0x1c] sm:%s448] %v471
                $region145: #{attention_forward.1} parent=132 // loop_footer
                  %s454 = sadd.s32 1, %s450
                $region146: #{attention_forward.1} parent=132 // loop_footer_branch
                  %449 = sbr.rel target = $region142
                $region147: #{attention_forward.1} parent=132 // loop_exit
                  _
              $region133: #{attention_forward.1} parent=117 // pred_fallthru
                _
            $region118: #{attention_forward.1} parent=113 // pred_fallthru
              _
            // Predicated region
            $region119: #{attention_forward.1} parent=113 // pred_check
              _
            $region120: #{attention_forward.1} parent=113 // pred_check_branch
              %410 = sbr.rel (0) target = $region122
            $region121: #{attention_forward.1} parent=113 // pred_region
              %s412 = ssub.s32 16, 1
              loop: start=0, step=1, limit=1
              $region123: #{attention_forward.1} parent=121 // loop_pre_header
                _
              $region124: #{attention_forward.1} parent=121 // loop_header
                %s414 = sphi 0, %s418
                %p415 = scmp.ge.s32.totalorder %s414, 1
                %s419 = sphi %s404, %s404
                %s420 = sphi %s396, %s396
              $region125: #{attention_forward.1} parent=121 // loop_header_branch
                %417 = sbr.rel (%p415) target = $region129
              $region126: #{attention_forward.1} parent=121 // loop_body
                %v421 = vld [vmem:[%s419] sm:%s412]
                %422 = vst [vmem:[%s420] sm:%s412] %v421
                %v423 = vld [vmem:[%s419 + $0x4] sm:%s412]
                %424 = vst [vmem:[%s420 + $0x4] sm:%s412] %v423
                %v425 = vld [vmem:[%s419 + $0x8] sm:%s412]
                %426 = vst [vmem:[%s420 + $0x8] sm:%s412] %v425
                %v427 = vld [vmem:[%s419 + $0xc] sm:%s412]
                %428 = vst [vmem:[%s420 + $0xc] sm:%s412] %v427
                %v429 = vld [vmem:[%s419 + $0x20] sm:%s412]
                %430 = vst [vmem:[%s420 + $0x10] sm:%s412] %v429
                %v431 = vld [vmem:[%s419 + $0x24] sm:%s412]
                %432 = vst [vmem:[%s420 + $0x14] sm:%s412] %v431
                %v433 = vld [vmem:[%s419 + $0x28] sm:%s412]
                %434 = vst [vmem:[%s420 + $0x18] sm:%s412] %v433
                %v435 = vld [vmem:[%s419 + $0x2c] sm:%s412]
                %436 = vst [vmem:[%s420 + $0x1c] sm:%s412] %v435
              $region127: #{attention_forward.1} parent=121 // loop_footer
                %s418 = sadd.s32 1, %s414
              $region128: #{attention_forward.1} parent=121 // loop_footer_branch
                %413 = sbr.rel target = $region124
              $region129: #{attention_forward.1} parent=121 // loop_exit
                _
            $region122: #{attention_forward.1} parent=113 // pred_fallthru
              _
          $region114: #{attention_forward.1} parent=109 // pred_fallthru
            _
          %473 = vnop
        $region110: #{attention_forward.1} parent=23 // pred_fallthru
          _
      $region24: #{attention_forward.1} parent=5 // pred_fallthru
        _
      %p474 = scmp.le.s32.totalorder 1, %s11
      %p475 = scmp.lt.s32.totalorder %s11, 17
      %p476 = pnand %p474, %p475
      %p477 = pneg %p476
      // Predicated region
      $region148: #{attention_forward.1} parent=5 // pred_check
        _
      $region149: #{attention_forward.1} parent=5 // pred_check_branch
        %479 = sbr.rel (%p476) target = $region151
      $region150: #{attention_forward.1} parent=5 // pred_region
        %s480 = ssub.s32 %s11, 1
        %s481 = sand.u32 %s54, 1
        %s482 = sand.u32 %s54, 1
        %s483 = smul.addr %s482, 32
        %s484 = scalar_lea.vmem [#allocation6], %s483
        // Predicated region
        $region152: #{attention_forward.1} parent=150 // pred_check
          %p485 = pneg %p67
        $region153: #{attention_forward.1} parent=150 // pred_check_branch
          %487 = sbr.rel (%p485) target = $region155
        $region154: #{attention_forward.1} parent=150 // pred_region
          _
        $region155: #{attention_forward.1} parent=150 // pred_fallthru
          _
        %s488 = sand.u32 %s84, 1
        %s489 = sand.u32 %s84, 1
        %s490 = smul.addr %s489, 32
        %s491 = scalar_lea.vmem [#allocation7], %s490
        // Predicated region
        $region156: #{attention_forward.1} parent=150 // pred_check
          %p492 = pneg %p97
        $region157: #{attention_forward.1} parent=150 // pred_check_branch
          %494 = sbr.rel (%p492) target = $region159
        $region158: #{attention_forward.1} parent=150 // pred_region
          _
        $region159: #{attention_forward.1} parent=150 // pred_fallthru
          _
        %s495 = sand.u32 %s114, 1
        %s496 = sand.u32 %s114, 1
        %s497 = smul.addr %s496, 32
        %s498 = scalar_lea.vmem [#allocation8], %s497
        // Predicated region
        $region160: #{attention_forward.1} parent=150 // pred_check
          %p499 = pneg %p127
        $region161: #{attention_forward.1} parent=150 // pred_check_branch
          %501 = sbr.rel (%p499) target = $region163
        $region162: #{attention_forward.1} parent=150 // pred_region
          _
        $region163: #{attention_forward.1} parent=150 // pred_fallthru
          _
        %s502 = sand.u32 %s54, 1
        %s503 = sand.u32 %s54, 1
        %s504 = smul.addr %s503, 32
        %s505 = scalar_lea.vmem [#allocation6], %s504
        %p506 = pneg %p67
        %p507 = pneg %p64
        %s508 = sand.u32 %s84, 1
        %s509 = sand.u32 %s84, 1
        %s510 = smul.addr %s509, 32
        %s511 = scalar_lea.vmem [#allocation7], %s510
        %p512 = pneg %p97
        %p513 = pneg %p94
        %s514 = sand.u32 %s114, 1
        %s515 = sand.u32 %s114, 1
        %s516 = smul.addr %s515, 32
        %s517 = scalar_lea.vmem [#allocation8], %s516
        %p518 = pneg %p127
        %p519 = pneg %p124
        %p520 = pneg %p148
        %p521 = pneg %p145
        %p522 = pneg %p169
        %p523 = pneg %p166
        %p524 = pneg %p197
        %p525 = pneg %p194
        %s526 = smul.u32 4, %s23
        %p527 = scmp.lt.s32.totalorder %s22, 1
        %s528 = scalar_select %p527, %s22, 1
        %p529 = scmp.lt.s32.totalorder %s526, 7
        %s530 = scalar_select %p529, %s526, 7
        %s531 = smul.addr %s528, 8
        %s532 = sadd.s32 %s530, %s531
        %s533 = smul.addr %s532, 8
        %s534 = scalar_lea.vmem %s5, %s533
        %s535 = smul.u32 2, %s24
        %s536 = smul.u32 4, %s23
        %s537 = smul.u32 2, %s24
        %s538 = smul.u32 4, %s25
        %s539 = smul.u32 2, %s24
        %s540 = smul.u32 4, %s25
        %s541 = smul.u32 4, %s23
        %p542 = scmp.lt.s32.totalorder %s22, 1
        %s543 = scalar_select %p542, %s22, 1
        %p544 = scmp.lt.s32.totalorder %s541, 7
        %s545 = scalar_select %p544, %s541, 7
        %s546 = smul.addr %s543, 8
        %s547 = sadd.s32 %s545, %s546
        %s548 = smul.addr %s547, 8
        %s549 = scalar_lea.vmem %s5, %s548
        %s550 = smul.u32 4, %s23
        %p552 = scmp.eq.s32.totalorder %s24, 0
        %p553 = scmp.eq.s32.totalorder %s25, 0
        %p554 = pnand %p552, %p553
        %p555 = pneg %p554
        // Predicated region
        $region164: #{attention_forward.1} parent=150 // pred_check
          _
        $region165: #{attention_forward.1} parent=150 // pred_check_branch
          %557 = sbr.rel (%p554) target = $region167
        $region166: #{attention_forward.1} parent=150 // pred_region
          %vm558 = vcmask 261120
          %559 = vst.msk [vmem:[#allocation5] sm:$0xff] %vm558, 0.0
          %560 = vst.msk [vmem:[#allocation5 + $0x8] sm:$0xff] %vm558, 0.0
          %561 = vst.msk [vmem:[#allocation5 + $0x10] sm:$0xff] %vm558, 0.0
          %562 = vst.msk [vmem:[#allocation5 + $0x18] sm:$0xff] %vm558, 0.0
        $region167: #{attention_forward.1} parent=150 // pred_fallthru
          _
        // Predicated region
        $region168: #{attention_forward.1} parent=150 // pred_check
          %p563 = pneg %p553
        $region169: #{attention_forward.1} parent=150 // pred_check_branch
          %565 = sbr.rel (%p563) target = $region171
        $region170: #{attention_forward.1} parent=150 // pred_region
          %vm566 = vcmask 7168
          %567 = vst.msk [vmem:[#allocation2] sm:$0xff] %vm566, -inf
          %568 = vst.msk [vmem:[#allocation2 + $0x8] sm:$0xff] %vm566, -inf
          %569 = vst.msk [vmem:[#allocation2 + $0x10] sm:$0xff] %vm566, -inf
          %570 = vst.msk [vmem:[#allocation2 + $0x18] sm:$0xff] %vm566, -inf
          %571 = vst.msk [vmem:[#allocation2 + $0x20] sm:$0xff] %vm566, -inf
          %572 = vst.msk [vmem:[#allocation2 + $0x28] sm:$0xff] %vm566, -inf
          %573 = vst.msk [vmem:[#allocation2 + $0x30] sm:$0xff] %vm566, -inf
          %574 = vst.msk [vmem:[#allocation2 + $0x38] sm:$0xff] %vm566, -inf
          %575 = vst.msk [vmem:[#allocation3] sm:$0xff] %vm566, 0.0
          %576 = vst.msk [vmem:[#allocation3 + $0x8] sm:$0xff] %vm566, 0.0
          %577 = vst.msk [vmem:[#allocation3 + $0x10] sm:$0xff] %vm566, 0.0
          %578 = vst.msk [vmem:[#allocation3 + $0x18] sm:$0xff] %vm566, 0.0
          %579 = vst.msk [vmem:[#allocation3 + $0x20] sm:$0xff] %vm566, 0.0
          %580 = vst.msk [vmem:[#allocation3 + $0x28] sm:$0xff] %vm566, 0.0
          %581 = vst.msk [vmem:[#allocation3 + $0x30] sm:$0xff] %vm566, 0.0
          %582 = vst.msk [vmem:[#allocation3 + $0x38] sm:$0xff] %vm566, 0.0
          %vm583 = vcmask 523264
          %584 = vst.msk [vmem:[#allocation4] sm:$0xff] %vm583, 0.0
          %585 = vst.msk [vmem:[#allocation4 + $0x8] sm:$0xff] %vm583, 0.0
          %586 = vst.msk [vmem:[#allocation4 + $0x10] sm:$0xff] %vm583, 0.0
          %587 = vst.msk [vmem:[#allocation4 + $0x18] sm:$0xff] %vm583, 0.0
          %588 = vst.msk [vmem:[#allocation4 + $0x20] sm:$0xff] %vm583, 0.0
          %589 = vst.msk [vmem:[#allocation4 + $0x28] sm:$0xff] %vm583, 0.0
          %590 = vst.msk [vmem:[#allocation4 + $0x30] sm:$0xff] %vm583, 0.0
          %591 = vst.msk [vmem:[#allocation4 + $0x38] sm:$0xff] %vm583, 0.0
        $region171: #{attention_forward.1} parent=150 // pred_fallthru
          _
        %v592 = vld [vmem:[%s484] sm:$0xf]
        %v593 = vld [vmem:[%s484 + $0x4] sm:$0xf]
        %v594 = vld [vmem:[%s484 + $0x8] sm:$0xf]
        %v595 = vld [vmem:[%s484 + $0xc] sm:$0xf]
        %v596 = vld [vmem:[%s484 + $0x10] sm:$0xf]
        %v597 = vld [vmem:[%s484 + $0x14] sm:$0xf]
        %v598 = vld [vmem:[%s484 + $0x18] sm:$0xf]
        %v599 = vld [vmem:[%s484 + $0x1c] sm:$0xf]
        %v600 = vld [vmem:[%s491] sm:$0xf]
        %v601 = vld [vmem:[%s491 + $0x4] sm:$0xf]
        %v602 = vld [vmem:[%s491 + $0x8] sm:$0xf]
        %v603 = vld [vmem:[%s491 + $0xc] sm:$0xf]
        %v604 = vld [vmem:[%s491 + $0x10] sm:$0xf]
        %v605 = vld [vmem:[%s491 + $0x14] sm:$0xf]
        %v606 = vld [vmem:[%s491 + $0x18] sm:$0xf]
        %v607 = vld [vmem:[%s491 + $0x1c] sm:$0xf]
        %v608 = vld [vmem:[%s498] sm:$0xf]
        %v609 = vld [vmem:[%s498 + $0x4] sm:$0xf]
        %v610 = vld [vmem:[%s498 + $0x8] sm:$0xf]
        %v611 = vld [vmem:[%s498 + $0xc] sm:$0xf]
        %v612 = vld [vmem:[%s498 + $0x10] sm:$0xf]
        %v613 = vld [vmem:[%s498 + $0x14] sm:$0xf]
        %v614 = vld [vmem:[%s498 + $0x18] sm:$0xf]
        %v615 = vld [vmem:[%s498 + $0x1c] sm:$0xf]
        %v620 = vunpack.c.l.b16 %v592
        %v621 = vunpack.c.l.b16 %v593
        %v622 = vunpack.c.l.b16 %v594
        %v623 = vunpack.c.l.b16 %v595
        %v624 = vpack.c.b16 %v621, %v620
        %v625 = vpack.c.b16 %v623, %v622
        %v630 = vunpack.c.l.b16 %v600
        %v631 = vunpack.c.l.b16 %v601
        %v632 = vunpack.c.l.b16 %v602
        %v633 = vunpack.c.l.b16 %v603
        %v634 = vpack.c.b16 %v631, %v630
        %v635 = vpack.c.b16 %v633, %v632
        %vm636 = vcmask 523264
        %v638 = vsel %vm636, %v624, 0
        %v641 = vsel %vm636, %v625, 0
        %v644 = vsel %vm636, %v634, 0
        %v647 = vsel %vm636, %v635, 0
        %649 = vmatpush.bf16.xpose.msra.mxu0 0
        %650 = vmatpush.bf16.xpose.msra.mxu0 0
        %651 = vmatpush.bf16.xpose.msra.mxu0 0
        %652 = vmatpush.bf16.xpose.msra.mxu0 0
        %653 = vmatpush.bf16.xpose.msra.mxu0 0
        %654 = vmatpush.bf16.xpose.msra.mxu0 0
        %655 = vmatpush.bf16.xpose.msra.mxu0 %v647
        %656 = vmatpush.bf16.xpose.msra.mxu0 %v644
        %657 = vmatmul.bf16.gmra.mxu0 %v638
        %v658 = vpop.f32.mrf.mxu0
        %v659 = vadd.f32 0.0, %v658
        %v660 = vpop.f32.mrf.mxu0
        %v661 = vadd.f32 0.0, %v660
        %662 = vmatmul.bf16.gmra.mxu0 %v641
        %v663 = vpop.f32.mrf.mxu0
        %v664 = vadd.f32 0.0, %v663
        %v665 = vpop.f32.mrf.mxu0
        %v666 = vadd.f32 0.0, %v665
        %667 = vdwg.mxu0
        %v672 = vunpack.c.l.b16 %v596
        %v673 = vunpack.c.l.b16 %v597
        %v674 = vunpack.c.l.b16 %v598
        %v675 = vunpack.c.l.b16 %v599
        %v676 = vpack.c.b16 %v673, %v672
        %v677 = vpack.c.b16 %v675, %v674
        %v682 = vunpack.c.l.b16 %v604
        %v683 = vunpack.c.l.b16 %v605
        %v684 = vunpack.c.l.b16 %v606
        %v685 = vunpack.c.l.b16 %v607
        %v686 = vpack.c.b16 %v683, %v682
        %v687 = vpack.c.b16 %v685, %v684
        %v689 = vsel %vm636, %v676, 0
        %v692 = vsel %vm636, %v677, 0
        %v695 = vsel %vm636, %v686, 0
        %v698 = vsel %vm636, %v687, 0
        %700 = vmatpush.bf16.xpose.msra.mxu0 0
        %701 = vmatpush.bf16.xpose.msra.mxu0 0
        %702 = vmatpush.bf16.xpose.msra.mxu0 0
        %703 = vmatpush.bf16.xpose.msra.mxu0 0
        %704 = vmatpush.bf16.xpose.msra.mxu0 0
        %705 = vmatpush.bf16.xpose.msra.mxu0 0
        %706 = vmatpush.bf16.xpose.msra.mxu0 %v698
        %707 = vmatpush.bf16.xpose.msra.mxu0 %v695
        %708 = vmatmul.bf16.gmra.mxu0 %v689
        %v709 = vpop.f32.mrf.mxu0
        %v710 = vadd.f32 0.0, %v709
        %v711 = vpop.f32.mrf.mxu0
        %v712 = vadd.f32 0.0, %v711
        %713 = vmatmul.bf16.gmra.mxu0 %v692
        %v714 = vpop.f32.mrf.mxu0
        %v715 = vadd.f32 0.0, %v714
        %v716 = vpop.f32.mrf.mxu0
        %v717 = vadd.f32 0.0, %v716
        %718 = vdwg.mxu0
        %v719 = vld [vmem:[#allocation2] sm:$0xff]
        %v720 = vld [vmem:[#allocation2 + $0x8] sm:$0xff]
        %v721 = vld [vmem:[#allocation2 + $0x10] sm:$0xff]
        %v722 = vld [vmem:[#allocation2 + $0x18] sm:$0xff]
        %v723 = vld [vmem:[#allocation2 + $0x20] sm:$0xff]
        %v724 = vld [vmem:[#allocation2 + $0x28] sm:$0xff]
        %v725 = vld [vmem:[#allocation2 + $0x30] sm:$0xff]
        %v726 = vld [vmem:[#allocation2 + $0x38] sm:$0xff]
        %vm727 = vcmask 261120
        %v728 = vsel %vm727, %v659, -inf
        %729 = vmax.xlane.f32.xlu0 %v728
        %v730 = vpop.xlane.xlu0 %729
        %v731 = vsel %vm727, %v661, -inf
        %732 = vmax.xlane.f32.xlu0 %v731
        %v733 = vpop.xlane.xlu0 %732
        %v734 = vsel %vm727, %v664, -inf
        %735 = vmax.xlane.f32.xlu0 %v734
        %v736 = vpop.xlane.xlu0 %735
        %v737 = vsel %vm727, %v666, -inf
        %738 = vmax.xlane.f32.xlu0 %v737
        %v739 = vpop.xlane.xlu0 %738
        %v740 = vsel %vm727, %v710, -inf
        %741 = vmax.xlane.f32.xlu0 %v740
        %v742 = vpop.xlane.xlu0 %741
        %v743 = vsel %vm727, %v712, -inf
        %744 = vmax.xlane.f32.xlu0 %v743
        %v745 = vpop.xlane.xlu0 %744
        %v746 = vsel %vm727, %v715, -inf
        %747 = vmax.xlane.f32.xlu0 %v746
        %v748 = vpop.xlane.xlu0 %747
        %v749 = vsel %vm727, %v717, -inf
        %750 = vmax.xlane.f32.xlu0 %v749
        %v751 = vpop.xlane.xlu0 %750
        %v752 = vmax.f32 %v719, %v730
        %v753 = vmax.f32 %v720, %v733
        %v754 = vmax.f32 %v721, %v736
        %v755 = vmax.f32 %v722, %v739
        %v756 = vmax.f32 %v723, %v742
        %v757 = vmax.f32 %v724, %v745
        %v758 = vmax.f32 %v725, %v748
        %v759 = vmax.f32 %v726, %v751
        %v760 = vsub.f32 %v719, %v752
        %v761 = vsub.f32 %v720, %v753
        %v762 = vsub.f32 %v721, %v754
        %v763 = vsub.f32 %v722, %v755
        %v764 = vsub.f32 %v723, %v756
        %v765 = vsub.f32 %v724, %v757
        %v766 = vsub.f32 %v725, %v758
        %v767 = vsub.f32 %v726, %v759
        %v768 = vmul.f32 %v760, 1.442695
        %v769 = vpow.pop %v768
        %v770 = vmul.f32 %v761, 1.442695
        %v771 = vpow.pop %v770
        %v772 = vmul.f32 %v762, 1.442695
        %v773 = vpow.pop %v772
        %v774 = vmul.f32 %v763, 1.442695
        %v775 = vpow.pop %v774
        %v776 = vmul.f32 %v764, 1.442695
        %v777 = vpow.pop %v776
        %v778 = vmul.f32 %v765, 1.442695
        %v779 = vpow.pop %v778
        %v780 = vmul.f32 %v766, 1.442695
        %v781 = vpow.pop %v780
        %v782 = vmul.f32 %v767, 1.442695
        %v783 = vpow.pop %v782
        %785 = vset.pattern.permute.xlu0 0
        %786 = vperm.xlu0 %785, %v752
        %v787 = vpop.permute.xlu0 %786
        %790 = vset.pattern.permute.xlu0 0
        %791 = vperm.xlu0 %790, %v753
        %v792 = vpop.permute.xlu0 %791
        %795 = vset.pattern.permute.xlu0 0
        %796 = vperm.xlu0 %795, %v754
        %v797 = vpop.permute.xlu0 %796
        %800 = vset.pattern.permute.xlu0 0
        %801 = vperm.xlu0 %800, %v755
        %v802 = vpop.permute.xlu0 %801
        %805 = vset.pattern.permute.xlu0 0
        %806 = vperm.xlu0 %805, %v756
        %v807 = vpop.permute.xlu0 %806
        %810 = vset.pattern.permute.xlu0 0
        %811 = vperm.xlu0 %810, %v757
        %v812 = vpop.permute.xlu0 %811
        %815 = vset.pattern.permute.xlu0 0
        %816 = vperm.xlu0 %815, %v758
        %v817 = vpop.permute.xlu0 %816
        %820 = vset.pattern.permute.xlu0 0
        %821 = vperm.xlu0 %820, %v759
        %v822 = vpop.permute.xlu0 %821
        %v824 = vsub.f32 %v659, %v787
        %v825 = vsub.f32 %v661, %v792
        %v826 = vsub.f32 %v664, %v797
        %v827 = vsub.f32 %v666, %v802
        %v828 = vsub.f32 %v710, %v807
        %v829 = vsub.f32 %v712, %v812
        %v830 = vsub.f32 %v715, %v817
        %v831 = vsub.f32 %v717, %v822
        %v832 = vmul.f32 %v824, 1.442695
        %v833 = vpow.pop %v832
        %v834 = vmul.f32 %v825, 1.442695
        %v835 = vpow.pop %v834
        %v836 = vmul.f32 %v826, 1.442695
        %v837 = vpow.pop %v836
        %v838 = vmul.f32 %v827, 1.442695
        %v839 = vpow.pop %v838
        %v840 = vmul.f32 %v828, 1.442695
        %v841 = vpow.pop %v840
        %v842 = vmul.f32 %v829, 1.442695
        %v843 = vpow.pop %v842
        %v844 = vmul.f32 %v830, 1.442695
        %v845 = vpow.pop %v844
        %v846 = vmul.f32 %v831, 1.442695
        %v847 = vpow.pop %v846
        %v848 = vld [vmem:[#allocation3] sm:$0xff]
        %v849 = vld [vmem:[#allocation3 + $0x8] sm:$0xff]
        %v850 = vld [vmem:[#allocation3 + $0x10] sm:$0xff]
        %v851 = vld [vmem:[#allocation3 + $0x18] sm:$0xff]
        %v852 = vld [vmem:[#allocation3 + $0x20] sm:$0xff]
        %v853 = vld [vmem:[#allocation3 + $0x28] sm:$0xff]
        %v854 = vld [vmem:[#allocation3 + $0x30] sm:$0xff]
        %v855 = vld [vmem:[#allocation3 + $0x38] sm:$0xff]
        %v856 = vmul.f32 %v769, %v848
        %v857 = vmul.f32 %v771, %v849
        %v858 = vmul.f32 %v773, %v850
        %v859 = vmul.f32 %v775, %v851
        %v860 = vmul.f32 %v777, %v852
        %v861 = vmul.f32 %v779, %v853
        %v862 = vmul.f32 %v781, %v854
        %v863 = vmul.f32 %v783, %v855
        %v864 = vsel %vm727, %v833, 0.0
        %865 = vadd.xlane.f32.xlu0 %v864
        %v866 = vpop.xlane.xlu0 %865
        %v867 = vsel %vm727, %v835, 0.0
        %868 = vadd.xlane.f32.xlu0 %v867
        %v869 = vpop.xlane.xlu0 %868
        %v870 = vsel %vm727, %v837, 0.0
        %871 = vadd.xlane.f32.xlu0 %v870
        %v872 = vpop.xlane.xlu0 %871
        %v873 = vsel %vm727, %v839, 0.0
        %874 = vadd.xlane.f32.xlu0 %v873
        %v875 = vpop.xlane.xlu0 %874
        %v876 = vsel %vm727, %v841, 0.0
        %877 = vadd.xlane.f32.xlu0 %v876
        %v878 = vpop.xlane.xlu0 %877
        %v879 = vsel %vm727, %v843, 0.0
        %880 = vadd.xlane.f32.xlu0 %v879
        %v881 = vpop.xlane.xlu0 %880
        %v882 = vsel %vm727, %v845, 0.0
        %883 = vadd.xlane.f32.xlu0 %v882
        %v884 = vpop.xlane.xlu0 %883
        %v885 = vsel %vm727, %v847, 0.0
        %886 = vadd.xlane.f32.xlu0 %v885
        %v887 = vpop.xlane.xlu0 %886
        %v888 = vadd.f32 %v856, %v866
        %v889 = vadd.f32 %v857, %v869
        %v890 = vadd.f32 %v858, %v872
        %v891 = vadd.f32 %v859, %v875
        %v892 = vadd.f32 %v860, %v878
        %v893 = vadd.f32 %v861, %v881
        %v894 = vadd.f32 %v862, %v884
        %v895 = vadd.f32 %v863, %v887
        %vm896 = vcmask 7168
        %897 = vst.msk [vmem:[#allocation3] sm:$0xff] %vm896, %v888
        %898 = vst.msk [vmem:[#allocation3 + $0x8] sm:$0xff] %vm896, %v889
        %899 = vst.msk [vmem:[#allocation3 + $0x10] sm:$0xff] %vm896, %v890
        %900 = vst.msk [vmem:[#allocation3 + $0x18] sm:$0xff] %vm896, %v891
        %901 = vst.msk [vmem:[#allocation3 + $0x20] sm:$0xff] %vm896, %v892
        %902 = vst.msk [vmem:[#allocation3 + $0x28] sm:$0xff] %vm896, %v893
        %903 = vst.msk [vmem:[#allocation3 + $0x30] sm:$0xff] %vm896, %v894
        %904 = vst.msk [vmem:[#allocation3 + $0x38] sm:$0xff] %vm896, %v895
        %v905 = vld [vmem:[#allocation4] sm:$0xff]
        %v906 = vld [vmem:[#allocation4 + $0x8] sm:$0xff]
        %v907 = vld [vmem:[#allocation4 + $0x10] sm:$0xff]
        %v908 = vld [vmem:[#allocation4 + $0x18] sm:$0xff]
        %v909 = vld [vmem:[#allocation4 + $0x20] sm:$0xff]
        %v910 = vld [vmem:[#allocation4 + $0x28] sm:$0xff]
        %v911 = vld [vmem:[#allocation4 + $0x30] sm:$0xff]
        %v912 = vld [vmem:[#allocation4 + $0x38] sm:$0xff]
        %914 = vset.pattern.permute.xlu0 0
        %915 = vperm.xlu0 %914, %v769
        %v916 = vpop.permute.xlu0 %915
        %919 = vset.pattern.permute.xlu0 0
        %920 = vperm.xlu0 %919, %v771
        %v921 = vpop.permute.xlu0 %920
        %924 = vset.pattern.permute.xlu0 0
        %925 = vperm.xlu0 %924, %v773
        %v926 = vpop.permute.xlu0 %925
        %929 = vset.pattern.permute.xlu0 0
        %930 = vperm.xlu0 %929, %v775
        %v931 = vpop.permute.xlu0 %930
        %934 = vset.pattern.permute.xlu0 0
        %935 = vperm.xlu0 %934, %v777
        %v936 = vpop.permute.xlu0 %935
        %939 = vset.pattern.permute.xlu0 0
        %940 = vperm.xlu0 %939, %v779
        %v941 = vpop.permute.xlu0 %940
        %944 = vset.pattern.permute.xlu0 0
        %945 = vperm.xlu0 %944, %v781
        %v946 = vpop.permute.xlu0 %945
        %949 = vset.pattern.permute.xlu0 0
        %950 = vperm.xlu0 %949, %v783
        %v951 = vpop.permute.xlu0 %950
        %v953 = vmul.f32 %v916, %v905
        %v954 = vmul.f32 %v921, %v906
        %v955 = vmul.f32 %v926, %v907
        %v956 = vmul.f32 %v931, %v908
        %v957 = vmul.f32 %v936, %v909
        %v958 = vmul.f32 %v941, %v910
        %v959 = vmul.f32 %v946, %v911
        %v960 = vmul.f32 %v951, %v912
        %v961 = vpack.c.bf16 %v833, %v833
        %v962 = vpack.c.bf16 %v835, %v835
        %v963 = vpack.c.bf16 %v837, %v837
        %v964 = vpack.c.bf16 %v839, %v839
        %v965 = vpack.c.bf16 %v841, %v841
        %v966 = vpack.c.bf16 %v843, %v843
        %v967 = vpack.c.bf16 %v845, %v845
        %v968 = vpack.c.bf16 %v847, %v847
        %v973 = vunpack.c.l.b16 %v961
        %v974 = vunpack.c.l.b16 %v962
        %v975 = vunpack.c.l.b16 %v963
        %v976 = vunpack.c.l.b16 %v964
        %v977 = vpack.c.b16 %v974, %v973
        %v978 = vpack.c.b16 %v976, %v975
        %v983 = vunpack.c.l.b16 %v608
        %v984 = vunpack.c.l.b16 %v609
        %v985 = vunpack.c.l.b16 %v610
        %v986 = vunpack.c.l.b16 %v611
        %v987 = vpack.c.b16 %v984, %v983
        %v988 = vpack.c.b16 %v986, %v985
        %v992 = vsel %vm727, %v977, 0
        %v995 = vsel %vm727, %v978, 0
        %997 = vmatpush.bf16.msra.mxu0 0
        %998 = vmatpush.bf16.msra.mxu0 0
        %999 = vmatpush.bf16.msra.mxu0 0
        %1000 = vmatpush.bf16.msra.mxu0 0
        %1001 = vmatpush.bf16.msra.mxu0 0
        %1002 = vmatpush.bf16.msra.mxu0 0
        %1003 = vmatpush.bf16.msra.mxu0 %v988
        %1004 = vmatpush.bf16.msra.mxu0 %v987
        %1005 = vmatmul.bf16.gmra.mxu0 %v992
        %v1006 = vpop.f32.mrf.mxu0
        %v1007 = vadd.f32 0.0, %v1006
        %v1008 = vpop.f32.mrf.mxu0
        %v1009 = vadd.f32 0.0, %v1008
        %1010 = vmatmul.bf16.gmra.mxu0 %v995
        %v1011 = vpop.f32.mrf.mxu0
        %v1012 = vadd.f32 0.0, %v1011
        %v1013 = vpop.f32.mrf.mxu0
        %v1014 = vadd.f32 0.0, %v1013
        %1015 = vdwg.mxu0
        %v1020 = vunpack.c.l.b16 %v965
        %v1021 = vunpack.c.l.b16 %v966
        %v1022 = vunpack.c.l.b16 %v967
        %v1023 = vunpack.c.l.b16 %v968
        %v1024 = vpack.c.b16 %v1021, %v1020
        %v1025 = vpack.c.b16 %v1023, %v1022
        %v1030 = vunpack.c.l.b16 %v612
        %v1031 = vunpack.c.l.b16 %v613
        %v1032 = vunpack.c.l.b16 %v614
        %v1033 = vunpack.c.l.b16 %v615
        %v1034 = vpack.c.b16 %v1031, %v1030
        %v1035 = vpack.c.b16 %v1033, %v1032
        %v1039 = vsel %vm727, %v1024, 0
        %v1042 = vsel %vm727, %v1025, 0
        %1044 = vmatpush.bf16.msra.mxu0 0
        %1045 = vmatpush.bf16.msra.mxu0 0
        %1046 = vmatpush.bf16.msra.mxu0 0
        %1047 = vmatpush.bf16.msra.mxu0 0
        %1048 = vmatpush.bf16.msra.mxu0 0
        %1049 = vmatpush.bf16.msra.mxu0 0
        %1050 = vmatpush.bf16.msra.mxu0 %v1035
        %1051 = vmatpush.bf16.msra.mxu0 %v1034
        %1052 = vmatmul.bf16.gmra.mxu0 %v1039
        %v1053 = vpop.f32.mrf.mxu0
        %v1054 = vadd.f32 0.0, %v1053
        %v1055 = vpop.f32.mrf.mxu0
        %v1056 = vadd.f32 0.0, %v1055
        %1057 = vmatmul.bf16.gmra.mxu0 %v1042
        %v1058 = vpop.f32.mrf.mxu0
        %v1059 = vadd.f32 0.0, %v1058
        %v1060 = vpop.f32.mrf.mxu0
        %v1061 = vadd.f32 0.0, %v1060
        %1062 = vdwg.mxu0
        %v1063 = vadd.f32 %v953, %v1007
        %v1064 = vadd.f32 %v954, %v1009
        %v1065 = vadd.f32 %v955, %v1012
        %v1066 = vadd.f32 %v956, %v1014
        %v1067 = vadd.f32 %v957, %v1054
        %v1068 = vadd.f32 %v958, %v1056
        %v1069 = vadd.f32 %v959, %v1059
        %v1070 = vadd.f32 %v960, %v1061
        %1071 = vst.msk [vmem:[#allocation4] sm:$0xff] %vm636, %v1063
        %1072 = vst.msk [vmem:[#allocation4 + $0x8] sm:$0xff] %vm636, %v1064
        %1073 = vst.msk [vmem:[#allocation4 + $0x10] sm:$0xff] %vm636, %v1065
        %1074 = vst.msk [vmem:[#allocation4 + $0x18] sm:$0xff] %vm636, %v1066
        %1075 = vst.msk [vmem:[#allocation4 + $0x20] sm:$0xff] %vm636, %v1067
        %1076 = vst.msk [vmem:[#allocation4 + $0x28] sm:$0xff] %vm636, %v1068
        %1077 = vst.msk [vmem:[#allocation4 + $0x30] sm:$0xff] %vm636, %v1069
        %1078 = vst.msk [vmem:[#allocation4 + $0x38] sm:$0xff] %vm636, %v1070
        %1079 = vst.msk [vmem:[#allocation2] sm:$0xff] %vm896, %v752
        %1080 = vst.msk [vmem:[#allocation2 + $0x8] sm:$0xff] %vm896, %v753
        %1081 = vst.msk [vmem:[#allocation2 + $0x10] sm:$0xff] %vm896, %v754
        %1082 = vst.msk [vmem:[#allocation2 + $0x18] sm:$0xff] %vm896, %v755
        %1083 = vst.msk [vmem:[#allocation2 + $0x20] sm:$0xff] %vm896, %v756
        %1084 = vst.msk [vmem:[#allocation2 + $0x28] sm:$0xff] %vm896, %v757
        %1085 = vst.msk [vmem:[#allocation2 + $0x30] sm:$0xff] %vm896, %v758
        %1086 = vst.msk [vmem:[#allocation2 + $0x38] sm:$0xff] %vm896, %v759
        %p1087 = scmp.eq.s32.totalorder %s25, 1
        // Predicated region
        $region172: #{attention_forward.1} parent=150 // pred_check
          %p1088 = pneg %p1087
        $region173: #{attention_forward.1} parent=150 // pred_check_branch
          %1090 = sbr.rel (%p1088) target = $region175
        $region174: #{attention_forward.1} parent=150 // pred_region
          %v1091 = vld [vmem:[#allocation4] sm:$0xff]
          %v1092 = vld [vmem:[#allocation4 + $0x8] sm:$0xff]
          %v1093 = vld [vmem:[#allocation4 + $0x10] sm:$0xff]
          %v1094 = vld [vmem:[#allocation4 + $0x18] sm:$0xff]
          %v1095 = vld [vmem:[#allocation4 + $0x20] sm:$0xff]
          %v1096 = vld [vmem:[#allocation4 + $0x28] sm:$0xff]
          %v1097 = vld [vmem:[#allocation4 + $0x30] sm:$0xff]
          %v1098 = vld [vmem:[#allocation4 + $0x38] sm:$0xff]
          %v1099 = vld [vmem:[#allocation3] sm:$0xff]
          %v1100 = vld [vmem:[#allocation3 + $0x8] sm:$0xff]
          %v1101 = vld [vmem:[#allocation3 + $0x10] sm:$0xff]
          %v1102 = vld [vmem:[#allocation3 + $0x18] sm:$0xff]
          %v1103 = vld [vmem:[#allocation3 + $0x20] sm:$0xff]
          %v1104 = vld [vmem:[#allocation3 + $0x28] sm:$0xff]
          %v1105 = vld [vmem:[#allocation3 + $0x30] sm:$0xff]
          %v1106 = vld [vmem:[#allocation3 + $0x38] sm:$0xff]
          %v1107 = vrcp.pop %v1099
          %v1108 = vrcp.pop %v1100
          %v1109 = vrcp.pop %v1101
          %v1110 = vrcp.pop %v1102
          %v1111 = vrcp.pop %v1103
          %v1112 = vrcp.pop %v1104
          %v1113 = vrcp.pop %v1105
          %v1114 = vrcp.pop %v1106
          %1116 = vset.pattern.permute.xlu0 0
          %1117 = vperm.xlu0 %1116, %v1107
          %v1118 = vpop.permute.xlu0 %1117
          %1121 = vset.pattern.permute.xlu0 0
          %1122 = vperm.xlu0 %1121, %v1108
          %v1123 = vpop.permute.xlu0 %1122
          %1126 = vset.pattern.permute.xlu0 0
          %1127 = vperm.xlu0 %1126, %v1109
          %v1128 = vpop.permute.xlu0 %1127
          %1131 = vset.pattern.permute.xlu0 0
          %1132 = vperm.xlu0 %1131, %v1110
          %v1133 = vpop.permute.xlu0 %1132
          %1136 = vset.pattern.permute.xlu0 0
          %1137 = vperm.xlu0 %1136, %v1111
          %v1138 = vpop.permute.xlu0 %1137
          %1141 = vset.pattern.permute.xlu0 0
          %1142 = vperm.xlu0 %1141, %v1112
          %v1143 = vpop.permute.xlu0 %1142
          %1146 = vset.pattern.permute.xlu0 0
          %1147 = vperm.xlu0 %1146, %v1113
          %v1148 = vpop.permute.xlu0 %1147
          %1151 = vset.pattern.permute.xlu0 0
          %1152 = vperm.xlu0 %1151, %v1114
          %v1153 = vpop.permute.xlu0 %1152
          %v1155 = vmul.f32 %v1091, %v1118
          %v1156 = vmul.f32 %v1092, %v1123
          %v1157 = vmul.f32 %v1093, %v1128
          %v1158 = vmul.f32 %v1094, %v1133
          %v1159 = vmul.f32 %v1095, %v1138
          %v1160 = vmul.f32 %v1096, %v1143
          %v1161 = vmul.f32 %v1097, %v1148
          %v1162 = vmul.f32 %v1098, %v1153
          %v1163 = vpack.c.bf16 %v1155, %v1155
          %v1164 = vpack.c.bf16 %v1156, %v1156
          %v1165 = vpack.c.bf16 %v1157, %v1157
          %v1166 = vpack.c.bf16 %v1158, %v1158
          %v1167 = vpack.c.bf16 %v1159, %v1159
          %v1168 = vpack.c.bf16 %v1160, %v1160
          %v1169 = vpack.c.bf16 %v1161, %v1161
          %v1170 = vpack.c.bf16 %v1162, %v1162
          %v1171 = vld [vmem:[#allocation5] sm:$0xff]
          %v1172 = vld [vmem:[#allocation5 + $0x8] sm:$0xff]
          %v1173 = vld [vmem:[#allocation5 + $0x10] sm:$0xff]
          %v1174 = vld [vmem:[#allocation5 + $0x18] sm:$0xff]
          %s1175 = smul.u32 %s24, 2
          %s1176 = smul.u32 %s1175, 8
          %s1177 = smul.addr %s1176, 4
          %s1178 = scalar_lea.vmem %s3, %s1177
          %v1179 = vld [vmem:[%s1178] sm:$0xf]
          %v1180 = vld [vmem:[%s1178 + $0x4] sm:$0xf]
          %v1181 = vld [vmem:[%s1178 + $0x8] sm:$0xf]
          %v1182 = vld [vmem:[%s1178 + $0xc] sm:$0xf]
          %v1183 = vld [vmem:[%s1178 + $0x10] sm:$0xf]
          %v1184 = vld [vmem:[%s1178 + $0x14] sm:$0xf]
          %v1185 = vld [vmem:[%s1178 + $0x18] sm:$0xf]
          %v1186 = vld [vmem:[%s1178 + $0x1c] sm:$0xf]
          %v1191 = vunpack.c.l.b16 %v1163
          %v1192 = vunpack.c.l.b16 %v1164
          %v1193 = vunpack.c.l.b16 %v1165
          %v1194 = vunpack.c.l.b16 %v1166
          %v1195 = vpack.c.b16 %v1192, %v1191
          %v1196 = vpack.c.b16 %v1194, %v1193
          %v1205 = vunpack.c.l.b16 %v1179
          %v1206 = vunpack.c.l.b16 %v1180
          %v1207 = vunpack.c.l.b16 %v1181
          %v1208 = vunpack.c.l.b16 %v1182
          %v1209 = vunpack.c.l.b16 %v1183
          %v1210 = vunpack.c.l.b16 %v1184
          %v1211 = vunpack.c.l.b16 %v1185
          %v1212 = vunpack.c.l.b16 %v1186
          %v1213 = vpack.c.b16 %v1206, %v1205
          %v1214 = vpack.c.b16 %v1208, %v1207
          %v1215 = vpack.c.b16 %v1210, %v1209
          %v1216 = vpack.c.b16 %v1212, %v1211
          %v1222 = vsel %vm636, %v1195, 0
          %v1225 = vsel %vm636, %v1196, 0
          %1227 = vmatpush.bf16.msra.mxu0 0
          %1228 = vmatpush.bf16.msra.mxu0 0
          %1229 = vmatpush.bf16.msra.mxu0 0
          %1230 = vmatpush.bf16.msra.mxu0 0
          %1231 = vmatpush.bf16.msra.mxu0 %v1216
          %1232 = vmatpush.bf16.msra.mxu0 %v1215
          %1233 = vmatpush.bf16.msra.mxu0 %v1214
          %1234 = vmatpush.bf16.msra.mxu0 %v1213
          %1235 = vmatmul.bf16.gmra.mxu0 %v1222
          %v1236 = vpop.f32.mrf.mxu0
          %v1237 = vadd.f32 0.0, %v1236
          %v1238 = vpop.f32.mrf.mxu0
          %v1239 = vadd.f32 0.0, %v1238
          %1240 = vmatmul.bf16.gmra.mxu0 %v1225
          %v1241 = vpop.f32.mrf.mxu0
          %v1242 = vadd.f32 0.0, %v1241
          %v1243 = vpop.f32.mrf.mxu0
          %v1244 = vadd.f32 0.0, %v1243
          %1245 = vdwg.mxu0
          %v1246 = vadd.f32 %v1171, %v1237
          %v1247 = vadd.f32 %v1172, %v1239
          %v1248 = vadd.f32 %v1173, %v1242
          %v1249 = vadd.f32 %v1174, %v1244
          %s1250 = sadd.s32 %s1175, 1
          %s1251 = smul.u32 %s1250, 8
          %s1252 = smul.addr %s1251, 4
          %s1253 = scalar_lea.vmem %s3, %s1252
          %v1254 = vld [vmem:[%s1253] sm:$0xf]
          %v1255 = vld [vmem:[%s1253 + $0x4] sm:$0xf]
          %v1256 = vld [vmem:[%s1253 + $0x8] sm:$0xf]
          %v1257 = vld [vmem:[%s1253 + $0xc] sm:$0xf]
          %v1258 = vld [vmem:[%s1253 + $0x10] sm:$0xf]
          %v1259 = vld [vmem:[%s1253 + $0x14] sm:$0xf]
          %v1260 = vld [vmem:[%s1253 + $0x18] sm:$0xf]
          %v1261 = vld [vmem:[%s1253 + $0x1c] sm:$0xf]
          %v1266 = vunpack.c.l.b16 %v1167
          %v1267 = vunpack.c.l.b16 %v1168
          %v1268 = vunpack.c.l.b16 %v1169
          %v1269 = vunpack.c.l.b16 %v1170
          %v1270 = vpack.c.b16 %v1267, %v1266
          %v1271 = vpack.c.b16 %v1269, %v1268
          %v1280 = vunpack.c.l.b16 %v1254
          %v1281 = vunpack.c.l.b16 %v1255
          %v1282 = vunpack.c.l.b16 %v1256
          %v1283 = vunpack.c.l.b16 %v1257
          %v1284 = vunpack.c.l.b16 %v1258
          %v1285 = vunpack.c.l.b16 %v1259
          %v1286 = vunpack.c.l.b16 %v1260
          %v1287 = vunpack.c.l.b16 %v1261
          %v1288 = vpack.c.b16 %v1281, %v1280
          %v1289 = vpack.c.b16 %v1283, %v1282
          %v1290 = vpack.c.b16 %v1285, %v1284
          %v1291 = vpack.c.b16 %v1287, %v1286
          %v1297 = vsel %vm636, %v1270, 0
          %v1300 = vsel %vm636, %v1271, 0
          %1302 = vmatpush.bf16.msra.mxu0 0
          %1303 = vmatpush.bf16.msra.mxu0 0
          %1304 = vmatpush.bf16.msra.mxu0 0
          %1305 = vmatpush.bf16.msra.mxu0 0
          %1306 = vmatpush.bf16.msra.mxu0 %v1291
          %1307 = vmatpush.bf16.msra.mxu0 %v1290
          %1308 = vmatpush.bf16.msra.mxu0 %v1289
          %1309 = vmatpush.bf16.msra.mxu0 %v1288
          %1310 = vmatmul.bf16.gmra.mxu0 %v1297
          %v1311 = vpop.f32.mrf.mxu0
          %v1312 = vadd.f32 0.0, %v1311
          %v1313 = vpop.f32.mrf.mxu0
          %v1314 = vadd.f32 0.0, %v1313
          %1315 = vmatmul.bf16.gmra.mxu0 %v1300
          %v1316 = vpop.f32.mrf.mxu0
          %v1317 = vadd.f32 0.0, %v1316
          %v1318 = vpop.f32.mrf.mxu0
          %v1319 = vadd.f32 0.0, %v1318
          %1320 = vdwg.mxu0
          %v1321 = vadd.f32 %v1246, %v1312
          %v1322 = vadd.f32 %v1247, %v1314
          %v1323 = vadd.f32 %v1248, %v1317
          %v1324 = vadd.f32 %v1249, %v1319
          %1325 = vst.msk [vmem:[#allocation5] sm:$0xff] %vm727, %v1321
          %1326 = vst.msk [vmem:[#allocation5 + $0x8] sm:$0xff] %vm727, %v1322
          %1327 = vst.msk [vmem:[#allocation5 + $0x10] sm:$0xff] %vm727, %v1323
          %1328 = vst.msk [vmem:[#allocation5 + $0x18] sm:$0xff] %vm727, %v1324
          %p1329 = scmp.eq.s32.totalorder %s24, 1
          // Predicated region
          $region176: #{attention_forward.1} parent=174 // pred_check
            %p1330 = pneg %p1329
          $region177: #{attention_forward.1} parent=174 // pred_check_branch
            %1332 = sbr.rel (%p1330) target = $region179
          $region178: #{attention_forward.1} parent=174 // pred_region
            %v1333 = vld [vmem:[#allocation5] sm:$0xff]
            %v1334 = vld [vmem:[#allocation5 + $0x8] sm:$0xff]
            %v1335 = vld [vmem:[#allocation5 + $0x10] sm:$0xff]
            %v1336 = vld [vmem:[#allocation5 + $0x18] sm:$0xff]
            %v1337 = vld [vmem:[%s4] sm:$0x1]
            %v1339 = vperm.slane %v1337, 0
            %v1341 = vadd.f32 %v1333, %v1339
            %v1342 = vadd.f32 %v1334, %v1339
            %v1343 = vadd.f32 %v1335, %v1339
            %v1344 = vadd.f32 %v1336, %v1339
            %1345 = vst.msk [vmem:[%s549] sm:$0xff] %vm727, %v1341
            %1346 = vst.msk [vmem:[%s549 + $0x8] sm:$0xff] %vm727, %v1342
            %1347 = vst.msk [vmem:[%s549 + $0x10] sm:$0xff] %vm727, %v1343
            %1348 = vst.msk [vmem:[%s549 + $0x18] sm:$0xff] %vm727, %v1344
          $region179: #{attention_forward.1} parent=174 // pred_fallthru
            _
        $region175: #{attention_forward.1} parent=150 // pred_fallthru
          _
        %s1349 = smul.u32 4, %s23
        %p1350 = scmp.lt.s32.totalorder %s22, 1
        %s1351 = scalar_select %p1350, %s22, 1
        %p1352 = scmp.lt.s32.totalorder %s1349, 7
        %s1353 = scalar_select %p1352, %s1349, 7
        %s1354 = smul.addr %s1351, 8
        %s1355 = sadd.s32 %s1353, %s1354
        %s1356 = smul.addr %s1355, 8
        %s1357 = scalar_lea.vmem %s5, %s1356
        // Predicated region
        $region180: #{attention_forward.1} parent=150 // pred_check
          %p1358 = pneg %p194
        $region181: #{attention_forward.1} parent=150 // pred_check_branch
          %1360 = sbr.rel (%p1358) target = $region183
        $region182: #{attention_forward.1} parent=150 // pred_region
          %s1361 = smul.u32 4, %s23
        $region183: #{attention_forward.1} parent=150 // pred_fallthru
          _
      $region151: #{attention_forward.1} parent=5 // pred_fallthru
        _
      %p1362 = scmp.le.s32.totalorder 2, %s11
      // Predicated region
      $region184: #{attention_forward.1} parent=5 // pred_check
        %p1363 = pneg %p1362
      $region185: #{attention_forward.1} parent=5 // pred_check_branch
        %1365 = sbr.rel (%p1363) target = $region187
      $region186: #{attention_forward.1} parent=5 // pred_region
        %s1366 = ssub.s32 %s11, 2
        // Predicated region
        $region188: #{attention_forward.1} parent=186 // pred_check
          %p1367 = pneg %p200
        $region189: #{attention_forward.1} parent=186 // pred_check_branch
          %1369 = sbr.rel (%p1367) target = $region191
        $region190: #{attention_forward.1} parent=186 // pred_region
          %s1370 = smul.u32 4, %s27
          %p1371 = scmp.lt.s32.totalorder %s26, 1
          %s1372 = scalar_select %p1371, %s26, 1
          %p1373 = scmp.lt.s32.totalorder %s1370, 7
          %s1374 = scalar_select %p1373, %s1370, 7
          %s1375 = smul.addr %s1372, 8
          %s1376 = sadd.s32 %s1374, %s1375
          %s1377 = smul.addr %s1376, 8
          %s1378 = scalar_lea.vmem %s5, %s1377
        $region191: #{attention_forward.1} parent=186 // pred_fallthru
          _
      $region187: #{attention_forward.1} parent=5 // pred_fallthru
        _
    $region6: #{attention_forward.1} parent=1 // loop_footer
      %s15 = sadd.s32 1, %s11
    $region7: #{attention_forward.1} parent=1 // loop_footer_branch
      %10 = sbr.rel target = $region3
    $region8: #{attention_forward.1} parent=1 // loop_exit
      _

</llo_original>
